<compile_context>
chip_gen: v6e
topology: v6e:2x2x1
jax: 0.10.0
libtpu: 0.0.40
codegen_flags: <defaults>
</compile_context>

<pallas_src>
import functools

import jax
import jax.numpy as jnp
from jax import lax
from jax.experimental import pallas as pl
from jax.experimental.pallas import tpu as pltpu


def _lane_shift(y, r):
    """result[:, p] = y[:, (p + r) % HW] for a static shift r in [0, HW).

    Pure lane relayout (static slices + concat on the lane axis) -- XLU work,
    equivalent to a lane roll but with unambiguous direction.
    """
    if r == 0:
        return y
    return jnp.concatenate([y[:, r:], y[:, :r]], axis=1)


def _c2f_kernel(masks_ref, x_ref, w3_ref, b3_ref, wp_ref, bp_ref, o_ref,
                patches_ref, *, H, W, Cs, NB, BT):
    """Fused C2f forward for BT images.

    masks_ref  : (9, H*W)          0/1 validity mask per 3x3 tap (output pixels)
    x_ref      : (BT, 2, Cs, H*W)  both input halves, NCHW-flat (spatial on lanes)
    w3_ref     : (NB, Cs, 9*Cs)    3x3 weight slabs, columns ordered (kh, kw, cin)
    b3_ref     : (NB, Cs, 1)       3x3 biases (f32)
    wp_ref     : (Cout, 2*Cs)      1x1 weights (first Cs columns hit processed x1)
    bp_ref     : (Cout, 1)         1x1 bias (f32)
    o_ref      : (BT, Cout, H*W)   output, NCHW-flat (lane-dense)
    patches_ref: (9*Cs, H*W)       im2col scratch (VMEM), MXU operand dtype
    """
    HW = H * W
    taps = [(dh, dw) for dh in (-1, 0, 1) for dw in (-1, 0, 1)]
    cdt = patches_ref.dtype                      # MXU operand dtype (f32 / bf16)

    # Hoist all weights / biases / masks out of the per-image & per-block loops.
    mask_rows = [masks_ref[t:t + 1, :] for t in range(len(taps))]   # (1, HW) each
    w3_blocks = [w3_ref[i] for i in range(NB)]                      # (Cs, 9*Cs)
    b3_blocks = [b3_ref[i] for i in range(NB)]                      # (Cs, 1)
    wp1 = wp_ref[:, :Cs]                                            # (Cout, Cs)
    wp2 = wp_ref[:, Cs:]                                            # (Cout, Cs)
    bp = bp_ref[...]                                                # (Cout, 1)

    for b in range(BT):
        y = x_ref[b, 0]                                             # (Cs, HW) f32
        x2 = x_ref[b, 1]                                            # (Cs, HW) f32

        # NB chained 3x3 'same' convs: build the 9 shifted/masked copies in the
        # im2col scratch (rows ordered (tap, cin)) and run ONE MXU contraction of
        # depth 9*Cs per block -- no per-tap accumulator adds.
        for blk in range(NB):
            for t, (dh, dw) in enumerate(taps):
                s = (dh * W + dw) % HW
                if s == 0:
                    v = y                                           # center tap: no shift/mask
                else:
                    v = _lane_shift(y, s) * mask_rows[t]            # kill wrapped pixels
                patches_ref[t * Cs:(t + 1) * Cs, :] = v.astype(cdt)
            y = jnp.dot(w3_blocks[blk], patches_ref[...],
                        preferred_element_type=jnp.float32)         # (Cs, HW) f32
            y = y + b3_blocks[blk]                                  # bias in f32

        # Fused split/concat/1x1: two (Cout, Cs) @ (Cs, HW) matmuls, lane-dense store.
        z = jnp.dot(wp1, y.astype(cdt), preferred_element_type=jnp.float32)
        z = z + jnp.dot(wp2, x2.astype(cdt), preferred_element_type=jnp.float32)
        o_ref[b] = (z + bp).astype(o_ref.dtype)


def c2f_forward(x, w3, b3, wp, bp, *, num_blocks=3, batch_tile=None,
                use_bf16_matmul=False):
    """x: (N, Cin, H, W) NCHW.  Returns (N, Cout, H, W), matching PyTorch C2f."""
    N, Cin, H, W = x.shape
    assert Cin % 2 == 0
    Cs = Cin // 2
    Cout = wp.shape[0]
    K = 3
    HW = H * W

    # Amortize the per-grid-step pipeline overhead: group images per step until a
    # step moves a few hundred KB, while keeping batch_tile | N.
    if batch_tile is None:
        per_image_bytes = (Cin + Cout) * HW * x.dtype.itemsize
        want = max(1, min(N, (256 * 1024) // max(per_image_bytes, 1)))
        batch_tile = 1
        for bt in range(want, 0, -1):
            if N % bt == 0:
                batch_tile = bt
                break
    assert N % batch_tile == 0

    # Free reshape: both halves are read straight out of NCHW (no transpose/copy).
    x_r = x.reshape(N, 2, Cs, HW)

    # 0/1 validity masks over output pixels for each 3x3 tap (dh, dw).
    ii = jnp.arange(H)[:, None]
    jj = jnp.arange(W)[None, :]
    rows = []
    for dh in (-1, 0, 1):
        for dw in (-1, 0, 1):
            m = (ii + dh >= 0) & (ii + dh < H) & (jj + dw >= 0) & (jj + dw < W)
            rows.append(m.reshape(HW))
    masks = jnp.stack(rows).astype(jnp.float32)                     # (9, HW)

    # (NB, O, I, 3, 3) -> (NB, O, kh, kw, I) -> (NB, O, 9*I): contraction columns
    # ordered (tap, cin) to match the im2col scratch built in-kernel.
    w3_slab = jnp.transpose(w3, (0, 1, 3, 4, 2)).reshape(num_blocks, Cs, K * K * Cs)
    b3_r = b3.reshape(num_blocks, Cs, 1).astype(jnp.float32)
    wp_t = wp.reshape(Cout, Cin)
    bp_r = bp.reshape(Cout, 1).astype(jnp.float32)

    compute_dtype = jnp.bfloat16 if use_bf16_matmul else jnp.float32
    if use_bf16_matmul:   # MXU operands only; bias adds / masks stay f32 (v5e VPU)
        w3_slab = w3_slab.astype(jnp.bfloat16)
        wp_t = wp_t.astype(jnp.bfloat16)

    kernel = functools.partial(_c2f_kernel, H=H, W=W, Cs=Cs, NB=num_blocks,
                               BT=batch_tile)

    out_flat = pl.pallas_call(
        kernel,
        out_shape=jax.ShapeDtypeStruct((N, Cout, HW), x.dtype),
        grid_spec=pltpu.PrefetchScalarGridSpec(
            num_scalar_prefetch=0,
            grid=(N // batch_tile,),
            in_specs=[
                pl.BlockSpec((K * K, HW), lambda n: (0, 0)),                    # masks
                pl.BlockSpec((batch_tile, 2, Cs, HW), lambda n: (n, 0, 0, 0)),  # x halves
                pl.BlockSpec((num_blocks, Cs, K * K * Cs), lambda n: (0, 0, 0)),
                pl.BlockSpec((num_blocks, Cs, 1), lambda n: (0, 0, 0)),
                pl.BlockSpec((Cout, Cin), lambda n: (0, 0)),
                pl.BlockSpec((Cout, 1), lambda n: (0, 0)),
            ],
            out_specs=pl.BlockSpec((batch_tile, Cout, HW), lambda n: (n, 0, 0)),
            scratch_shapes=[pltpu.VMEM((K * K * Cs, HW), compute_dtype)],
        ),
        compiler_params=pltpu.CompilerParams(
            dimension_semantics=("parallel",),
            vmem_limit_bytes=32 * 1024 * 1024,
        ),
    )(masks, x_r, w3_slab, b3_r, wp_t, bp_r)

    # (N, Cout, H*W) -> (N, Cout, H, W): free reshape, no transpose.
    return out_flat.reshape(N, Cout, H, W)


def _reference_forward(x, w3, b3, wp, bp):
    """Pure-JAX NCHW reference mirroring the PyTorch C2f module."""
    Cs = x.shape[1] // 2
    x1, x2 = x[:, :Cs], x[:, Cs:]
    y = x1
    for i in range(w3.shape[0]):
        y = lax.conv_general_dilated(
            y, w3[i], window_strides=(1, 1), padding=((1, 1), (1, 1)),
            dimension_numbers=("NCHW", "OIHW", "NCHW"))
        y = y + b3[i].reshape(1, -1, 1, 1)
    cat = jnp.concatenate([y, x2], axis=1)
    out = lax.conv_general_dilated(
        cat, wp, window_strides=(1, 1), padding=((0, 0), (0, 0)),
        dimension_numbers=("NCHW", "OIHW", "NCHW"))
    return out + bp.reshape(1, -1, 1, 1)


if __name__ == "__main__":
    key = jax.random.PRNGKey(0)
    k_x, k_w3, k_b3, k_wp, k_bp = jax.random.split(key, 5)

    N, Cin, H, W = 2, 4, 16, 16
    Cout, NB = 8, 3
    Cs = Cin // 2

    x = jax.random.normal(k_x, (N, Cin, H, W), jnp.float32)
    w3 = jax.random.normal(k_w3, (NB, Cs, Cs, 3, 3), jnp.float32) * 0.2   # 3x3 convs, bias=True
    b3 = jax.random.normal(k_b3, (NB, Cs), jnp.float32) * 0.1
    wp = jax.random.normal(k_wp, (Cout, Cin, 1, 1), jnp.float32) * 0.2    # 1x1 conv, bias=True
    bp = jax.random.normal(k_bp, (Cout,), jnp.float32) * 0.1

    out = c2f_forward(x, w3, b3, wp, bp, num_blocks=NB)
    out = jax.block_until_ready(out)

    ref = _reference_forward(x, w3, b3, wp, bp)
    assert out.shape == (N, Cout, H, W)
    assert jnp.allclose(out, ref, atol=1e-3, rtol=1e-3), "mismatch vs reference"

    print("KERNEL_OK")
</pallas_src>

<mosaic_0001>
module attributes {stable_mosaic.version = 11 : i64} {
  func.func @_c2f_kernel(%arg0: i32, %arg1: memref<9x256xf32, #tpu.memory_space<vmem>>, %arg2: memref<2x2x2x256xf32, #tpu.memory_space<vmem>>, %arg3: memref<3x2x18xf32, #tpu.memory_space<vmem>>, %arg4: memref<3x2x1xf32, #tpu.memory_space<vmem>>, %arg5: memref<8x4xf32, #tpu.memory_space<vmem>>, %arg6: memref<8x1xf32, #tpu.memory_space<vmem>>, %arg7: memref<2x8x256xf32, #tpu.memory_space<vmem>>, %arg8: memref<18x256xf32, #tpu.memory_space<vmem>>) attributes {dimension_semantics = [#tpu.dimension_semantics<parallel>], iteration_bounds = array<i64: 1>, scalar_prefetch = 0 : i64, scratch_operands = 1 : i64, tpu.core_type = #tpu.core_type<tc>, window_params = [{pipeline_mode = #tpu.pipeline_mode<synchronous>, transform_indices = @transform_0, window_bounds = array<i64: 9, 256>}, {transform_indices = @transform_1, window_bounds = array<i64: 2, 2, 2, 256>}, {pipeline_mode = #tpu.pipeline_mode<synchronous>, transform_indices = @transform_2, window_bounds = array<i64: 3, 2, 18>}, {pipeline_mode = #tpu.pipeline_mode<synchronous>, transform_indices = @transform_3, window_bounds = array<i64: 3, 2, 1>}, {pipeline_mode = #tpu.pipeline_mode<synchronous>, transform_indices = @transform_4, window_bounds = array<i64: 8, 4>}, {pipeline_mode = #tpu.pipeline_mode<synchronous>, transform_indices = @transform_5, window_bounds = array<i64: 8, 1>}, {transform_indices = @transform_6, window_bounds = array<i64: 2, 8, 256>}]} {
    %c0 = arith.constant 0 : index
    %c0_0 = arith.constant 0 : index
    %0 = vector.load %arg1[%c0, %c0_0] : memref<9x256xf32, #tpu.memory_space<vmem>>, vector<1x256xf32>
    %c1 = arith.constant 1 : index
    %c0_1 = arith.constant 0 : index
    %1 = vector.load %arg1[%c1, %c0_1] : memref<9x256xf32, #tpu.memory_space<vmem>>, vector<1x256xf32>
    %c2 = arith.constant 2 : index
    %c0_2 = arith.constant 0 : index
    %2 = vector.load %arg1[%c2, %c0_2] : memref<9x256xf32, #tpu.memory_space<vmem>>, vector<1x256xf32>
    %c3 = arith.constant 3 : index
    %c0_3 = arith.constant 0 : index
    %3 = vector.load %arg1[%c3, %c0_3] : memref<9x256xf32, #tpu.memory_space<vmem>>, vector<1x256xf32>
    %c5 = arith.constant 5 : index
    %c0_4 = arith.constant 0 : index
    %4 = vector.load %arg1[%c5, %c0_4] : memref<9x256xf32, #tpu.memory_space<vmem>>, vector<1x256xf32>
    %c6 = arith.constant 6 : index
    %c0_5 = arith.constant 0 : index
    %5 = vector.load %arg1[%c6, %c0_5] : memref<9x256xf32, #tpu.memory_space<vmem>>, vector<1x256xf32>
    %c7 = arith.constant 7 : index
    %c0_6 = arith.constant 0 : index
    %6 = vector.load %arg1[%c7, %c0_6] : memref<9x256xf32, #tpu.memory_space<vmem>>, vector<1x256xf32>
    %c8 = arith.constant 8 : index
    %c0_7 = arith.constant 0 : index
    %7 = vector.load %arg1[%c8, %c0_7] : memref<9x256xf32, #tpu.memory_space<vmem>>, vector<1x256xf32>
    %c0_8 = arith.constant 0 : index
    %c0_9 = arith.constant 0 : index
    %c0_10 = arith.constant 0 : index
    %8 = vector.load %arg3[%c0_8, %c0_9, %c0_10] : memref<3x2x18xf32, #tpu.memory_space<vmem>>, vector<1x2x18xf32>
    %9 = vector.shape_cast %8 : vector<1x2x18xf32> to vector<2x18xf32>
    %c1_11 = arith.constant 1 : index
    %c0_12 = arith.constant 0 : index
    %c0_13 = arith.constant 0 : index
    %10 = vector.load %arg3[%c1_11, %c0_12, %c0_13] : memref<3x2x18xf32, #tpu.memory_space<vmem>>, vector<1x2x18xf32>
    %11 = vector.shape_cast %10 : vector<1x2x18xf32> to vector<2x18xf32>
    %c2_14 = arith.constant 2 : index
    %c0_15 = arith.constant 0 : index
    %c0_16 = arith.constant 0 : index
    %12 = vector.load %arg3[%c2_14, %c0_15, %c0_16] : memref<3x2x18xf32, #tpu.memory_space<vmem>>, vector<1x2x18xf32>
    %13 = vector.shape_cast %12 : vector<1x2x18xf32> to vector<2x18xf32>
    %c0_17 = arith.constant 0 : index
    %c0_18 = arith.constant 0 : index
    %c0_19 = arith.constant 0 : index
    %14 = vector.load %arg4[%c0_17, %c0_18, %c0_19] : memref<3x2x1xf32, #tpu.memory_space<vmem>>, vector<1x2x1xf32>
    %15 = vector.shape_cast %14 : vector<1x2x1xf32> to vector<2x1xf32>
    %c1_20 = arith.constant 1 : index
    %c0_21 = arith.constant 0 : index
    %c0_22 = arith.constant 0 : index
    %16 = vector.load %arg4[%c1_20, %c0_21, %c0_22] : memref<3x2x1xf32, #tpu.memory_space<vmem>>, vector<1x2x1xf32>
    %17 = vector.shape_cast %16 : vector<1x2x1xf32> to vector<2x1xf32>
    %c2_23 = arith.constant 2 : index
    %c0_24 = arith.constant 0 : index
    %c0_25 = arith.constant 0 : index
    %18 = vector.load %arg4[%c2_23, %c0_24, %c0_25] : memref<3x2x1xf32, #tpu.memory_space<vmem>>, vector<1x2x1xf32>
    %19 = vector.shape_cast %18 : vector<1x2x1xf32> to vector<2x1xf32>
    %c0_26 = arith.constant 0 : index
    %c0_27 = arith.constant 0 : index
    %20 = vector.load %arg5[%c0_26, %c0_27] : memref<8x4xf32, #tpu.memory_space<vmem>>, vector<8x2xf32>
    %c0_28 = arith.constant 0 : index
    %c2_29 = arith.constant 2 : index
    %21 = vector.load %arg5[%c0_28, %c2_29] : memref<8x4xf32, #tpu.memory_space<vmem>>, vector<8x2xf32>
    %c0_30 = arith.constant 0 : index
    %c0_31 = arith.constant 0 : index
    %22 = vector.load %arg6[%c0_30, %c0_31] : memref<8x1xf32, #tpu.memory_space<vmem>>, vector<8x1xf32>
    %c0_32 = arith.constant 0 : index
    %c0_33 = arith.constant 0 : index
    %c0_34 = arith.constant 0 : index
    %c0_35 = arith.constant 0 : index
    %23 = vector.load %arg2[%c0_32, %c0_33, %c0_34, %c0_35] : memref<2x2x2x256xf32, #tpu.memory_space<vmem>>, vector<1x1x2x256xf32>
    %24 = vector.shape_cast %23 : vector<1x1x2x256xf32> to vector<2x256xf32>
    %c0_36 = arith.constant 0 : index
    %c1_37 = arith.constant 1 : index
    %c0_38 = arith.constant 0 : index
    %c0_39 = arith.constant 0 : index
    %25 = vector.load %arg2[%c0_36, %c1_37, %c0_38, %c0_39] : memref<2x2x2x256xf32, #tpu.memory_space<vmem>>, vector<1x1x2x256xf32>
    %26 = vector.shape_cast %25 : vector<1x1x2x256xf32> to vector<2x256xf32>
    %27 = vector.extract_strided_slice %24 {offsets = [0, 239], sizes = [2, 17], strides = [1, 1]} : vector<2x256xf32> to vector<2x17xf32>
    %28 = vector.extract_strided_slice %24 {offsets = [0, 0], sizes = [2, 239], strides = [1, 1]} : vector<2x256xf32> to vector<2x239xf32>
    %29 = tpu.concatenate %27, %28 in 1 : vector<2x17xf32>, vector<2x239xf32> -> vector<2x256xf32>
    %30 = vector.broadcast %0 : vector<1x256xf32> to vector<2x256xf32>
    %31 = arith.mulf %29, %30 : vector<2x256xf32>
    %c0_40 = arith.constant 0 : index
    %c0_41 = arith.constant 0 : index
    %32 = vector.load %arg8[%c0_40, %c0_41] : memref<18x256xf32, #tpu.memory_space<vmem>>, vector<2x256xf32>
    tpu.vector_store %arg8[%c0_40, %c0_41], %31 {strides = array<i32>} : memref<18x256xf32, #tpu.memory_space<vmem>>, vector<2x256xf32>,
    %33 = vector.extract_strided_slice %24 {offsets = [0, 240], sizes = [2, 16], strides = [1, 1]} : vector<2x256xf32> to vector<2x16xf32>
    %34 = vector.extract_strided_slice %24 {offsets = [0, 0], sizes = [2, 240], strides = [1, 1]} : vector<2x256xf32> to vector<2x240xf32>
    %35 = tpu.concatenate %33, %34 in 1 : vector<2x16xf32>, vector<2x240xf32> -> vector<2x256xf32>
    %36 = vector.broadcast %1 : vector<1x256xf32> to vector<2x256xf32>
    %37 = arith.mulf %35, %36 : vector<2x256xf32>
    %c2_42 = arith.constant 2 : index
    %c0_43 = arith.constant 0 : index
    %38 = vector.load %arg8[%c2_42, %c0_43] : memref<18x256xf32, #tpu.memory_space<vmem>>, vector<2x256xf32>
    tpu.vector_store %arg8[%c2_42, %c0_43], %37 {strides = array<i32>} : memref<18x256xf32, #tpu.memory_space<vmem>>, vector<2x256xf32>,
    %39 = vector.extract_strided_slice %24 {offsets = [0, 241], sizes = [2, 15], strides = [1, 1]} : vector<2x256xf32> to vector<2x15xf32>
    %40 = vector.extract_strided_slice %24 {offsets = [0, 0], sizes = [2, 241], strides = [1, 1]} : vector<2x256xf32> to vector<2x241xf32>
    %41 = tpu.concatenate %39, %40 in 1 : vector<2x15xf32>, vector<2x241xf32> -> vector<2x256xf32>
    %42 = vector.broadcast %2 : vector<1x256xf32> to vector<2x256xf32>
    %43 = arith.mulf %41, %42 : vector<2x256xf32>
    %c4 = arith.constant 4 : index
    %c0_44 = arith.constant 0 : index
    %44 = vector.load %arg8[%c4, %c0_44] : memref<18x256xf32, #tpu.memory_space<vmem>>, vector<2x256xf32>
    tpu.vector_store %arg8[%c4, %c0_44], %43 {strides = array<i32>} : memref<18x256xf32, #tpu.memory_space<vmem>>, vector<2x256xf32>,
    %45 = vector.extract_strided_slice %24 {offsets = [0, 255], sizes = [2, 1], strides = [1, 1]} : vector<2x256xf32> to vector<2x1xf32>
    %46 = vector.extract_strided_slice %24 {offsets = [0, 0], sizes = [2, 255], strides = [1, 1]} : vector<2x256xf32> to vector<2x255xf32>
    %47 = tpu.concatenate %45, %46 in 1 : vector<2x1xf32>, vector<2x255xf32> -> vector<2x256xf32>
    %48 = vector.broadcast %3 : vector<1x256xf32> to vector<2x256xf32>
    %49 = arith.mulf %47, %48 : vector<2x256xf32>
    %c6_45 = arith.constant 6 : index
    %c0_46 = arith.constant 0 : index
    %50 = vector.load %arg8[%c6_45, %c0_46] : memref<18x256xf32, #tpu.memory_space<vmem>>, vector<2x256xf32>
    tpu.vector_store %arg8[%c6_45, %c0_46], %49 {strides = array<i32>} : memref<18x256xf32, #tpu.memory_space<vmem>>, vector<2x256xf32>,
    %c8_47 = arith.constant 8 : index
    %c0_48 = arith.constant 0 : index
    %51 = vector.load %arg8[%c8_47, %c0_48] : memref<18x256xf32, #tpu.memory_space<vmem>>, vector<2x256xf32>
    tpu.vector_store %arg8[%c8_47, %c0_48], %24 {strides = array<i32>} : memref<18x256xf32, #tpu.memory_space<vmem>>, vector<2x256xf32>,
    %52 = vector.extract_strided_slice %24 {offsets = [0, 1], sizes = [2, 255], strides = [1, 1]} : vector<2x256xf32> to vector<2x255xf32>
    %53 = vector.extract_strided_slice %24 {offsets = [0, 0], sizes = [2, 1], strides = [1, 1]} : vector<2x256xf32> to vector<2x1xf32>
    %54 = tpu.concatenate %52, %53 in 1 : vector<2x255xf32>, vector<2x1xf32> -> vector<2x256xf32>
    %55 = vector.broadcast %4 : vector<1x256xf32> to vector<2x256xf32>
    %56 = arith.mulf %54, %55 : vector<2x256xf32>
    %c10 = arith.constant 10 : index
    %c0_49 = arith.constant 0 : index
    %57 = vector.load %arg8[%c10, %c0_49] : memref<18x256xf32, #tpu.memory_space<vmem>>, vector<2x256xf32>
    tpu.vector_store %arg8[%c10, %c0_49], %56 {strides = array<i32>} : memref<18x256xf32, #tpu.memory_space<vmem>>, vector<2x256xf32>,
    %58 = vector.extract_strided_slice %24 {offsets = [0, 15], sizes = [2, 241], strides = [1, 1]} : vector<2x256xf32> to vector<2x241xf32>
    %59 = vector.extract_strided_slice %24 {offsets = [0, 0], sizes = [2, 15], strides = [1, 1]} : vector<2x256xf32> to vector<2x15xf32>
    %60 = tpu.concatenate %58, %59 in 1 : vector<2x241xf32>, vector<2x15xf32> -> vector<2x256xf32>
    %61 = vector.broadcast %5 : vector<1x256xf32> to vector<2x256xf32>
    %62 = arith.mulf %60, %61 : vector<2x256xf32>
    %c12 = arith.constant 12 : index
    %c0_50 = arith.constant 0 : index
    %63 = vector.load %arg8[%c12, %c0_50] : memref<18x256xf32, #tpu.memory_space<vmem>>, vector<2x256xf32>
    tpu.vector_store %arg8[%c12, %c0_50], %62 {strides = array<i32>} : memref<18x256xf32, #tpu.memory_space<vmem>>, vector<2x256xf32>,
    %64 = vector.extract_strided_slice %24 {offsets = [0, 16], sizes = [2, 240], strides = [1, 1]} : vector<2x256xf32> to vector<2x240xf32>
    %65 = vector.extract_strided_slice %24 {offsets = [0, 0], sizes = [2, 16], strides = [1, 1]} : vector<2x256xf32> to vector<2x16xf32>
    %66 = tpu.concatenate %64, %65 in 1 : vector<2x240xf32>, vector<2x16xf32> -> vector<2x256xf32>
    %67 = vector.broadcast %6 : vector<1x256xf32> to vector<2x256xf32>
    %68 = arith.mulf %66, %67 : vector<2x256xf32>
    %c14 = arith.constant 14 : index
    %c0_51 = arith.constant 0 : index
    %69 = vector.load %arg8[%c14, %c0_51] : memref<18x256xf32, #tpu.memory_space<vmem>>, vector<2x256xf32>
    tpu.vector_store %arg8[%c14, %c0_51], %68 {strides = array<i32>} : memref<18x256xf32, #tpu.memory_space<vmem>>, vector<2x256xf32>,
    %70 = vector.extract_strided_slice %24 {offsets = [0, 17], sizes = [2, 239], strides = [1, 1]} : vector<2x256xf32> to vector<2x239xf32>
    %71 = vector.extract_strided_slice %24 {offsets = [0, 0], sizes = [2, 17], strides = [1, 1]} : vector<2x256xf32> to vector<2x17xf32>
    %72 = tpu.concatenate %70, %71 in 1 : vector<2x239xf32>, vector<2x17xf32> -> vector<2x256xf32>
    %73 = vector.broadcast %7 : vector<1x256xf32> to vector<2x256xf32>
    %74 = arith.mulf %72, %73 : vector<2x256xf32>
    %c16 = arith.constant 16 : index
    %c0_52 = arith.constant 0 : index
    %75 = vector.load %arg8[%c16, %c0_52] : memref<18x256xf32, #tpu.memory_space<vmem>>, vector<2x256xf32>
    tpu.vector_store %arg8[%c16, %c0_52], %74 {strides = array<i32>} : memref<18x256xf32, #tpu.memory_space<vmem>>, vector<2x256xf32>,
    %c0_53 = arith.constant 0 : index
    %c0_54 = arith.constant 0 : index
    %76 = vector.load %arg8[%c0_53, %c0_54] : memref<18x256xf32, #tpu.memory_space<vmem>>, vector<18x256xf32>
    %cst = arith.constant dense<0.000000e+00> : vector<2x256xf32>
    %77 = tpu.matmul %9, %76, %cst {dimension_numbers = #tpu.dot_dimension_numbers<[1], [0], [0], [1], [0, 0, 1, 1], [], []>} : vector<2x18xf32>, vector<18x256xf32>, vector<2x256xf32> -> vector<2x256xf32>
    %78 = vector.broadcast %15 : vector<2x1xf32> to vector<2x256xf32>
    %79 = arith.addf %77, %78 : vector<2x256xf32>
    %80 = vector.extract_strided_slice %79 {offsets = [0, 239], sizes = [2, 17], strides = [1, 1]} : vector<2x256xf32> to vector<2x17xf32>
    %81 = vector.extract_strided_slice %79 {offsets = [0, 0], sizes = [2, 239], strides = [1, 1]} : vector<2x256xf32> to vector<2x239xf32>
    %82 = tpu.concatenate %80, %81 in 1 : vector<2x17xf32>, vector<2x239xf32> -> vector<2x256xf32>
    %83 = vector.broadcast %0 : vector<1x256xf32> to vector<2x256xf32>
    %84 = arith.mulf %82, %83 : vector<2x256xf32>
    %c0_55 = arith.constant 0 : index
    %c0_56 = arith.constant 0 : index
    %85 = vector.load %arg8[%c0_55, %c0_56] : memref<18x256xf32, #tpu.memory_space<vmem>>, vector<2x256xf32>
    tpu.vector_store %arg8[%c0_55, %c0_56], %84 {strides = array<i32>} : memref<18x256xf32, #tpu.memory_space<vmem>>, vector<2x256xf32>,
    %86 = vector.extract_strided_slice %79 {offsets = [0, 240], sizes = [2, 16], strides = [1, 1]} : vector<2x256xf32> to vector<2x16xf32>
    %87 = vector.extract_strided_slice %79 {offsets = [0, 0], sizes = [2, 240], strides = [1, 1]} : vector<2x256xf32> to vector<2x240xf32>
    %88 = tpu.concatenate %86, %87 in 1 : vector<2x16xf32>, vector<2x240xf32> -> vector<2x256xf32>
    %89 = vector.broadcast %1 : vector<1x256xf32> to vector<2x256xf32>
    %90 = arith.mulf %88, %89 : vector<2x256xf32>
    %c2_57 = arith.constant 2 : index
    %c0_58 = arith.constant 0 : index
    %91 = vector.load %arg8[%c2_57, %c0_58] : memref<18x256xf32, #tpu.memory_space<vmem>>, vector<2x256xf32>
    tpu.vector_store %arg8[%c2_57, %c0_58], %90 {strides = array<i32>} : memref<18x256xf32, #tpu.memory_space<vmem>>, vector<2x256xf32>,
    %92 = vector.extract_strided_slice %79 {offsets = [0, 241], sizes = [2, 15], strides = [1, 1]} : vector<2x256xf32> to vector<2x15xf32>
    %93 = vector.extract_strided_slice %79 {offsets = [0, 0], sizes = [2, 241], strides = [1, 1]} : vector<2x256xf32> to vector<2x241xf32>
    %94 = tpu.concatenate %92, %93 in 1 : vector<2x15xf32>, vector<2x241xf32> -> vector<2x256xf32>
    %95 = vector.broadcast %2 : vector<1x256xf32> to vector<2x256xf32>
    %96 = arith.mulf %94, %95 : vector<2x256xf32>
    %c4_59 = arith.constant 4 : index
    %c0_60 = arith.constant 0 : index
    %97 = vector.load %arg8[%c4_59, %c0_60] : memref<18x256xf32, #tpu.memory_space<vmem>>, vector<2x256xf32>
    tpu.vector_store %arg8[%c4_59, %c0_60], %96 {strides = array<i32>} : memref<18x256xf32, #tpu.memory_space<vmem>>, vector<2x256xf32>,
    %98 = vector.extract_strided_slice %79 {offsets = [0, 255], sizes = [2, 1], strides = [1, 1]} : vector<2x256xf32> to vector<2x1xf32>
    %99 = vector.extract_strided_slice %79 {offsets = [0, 0], sizes = [2, 255], strides = [1, 1]} : vector<2x256xf32> to vector<2x255xf32>
    %100 = tpu.concatenate %98, %99 in 1 : vector<2x1xf32>, vector<2x255xf32> -> vector<2x256xf32>
    %101 = vector.broadcast %3 : vector<1x256xf32> to vector<2x256xf32>
    %102 = arith.mulf %100, %101 : vector<2x256xf32>
    %c6_61 = arith.constant 6 : index
    %c0_62 = arith.constant 0 : index
    %103 = vector.load %arg8[%c6_61, %c0_62] : memref<18x256xf32, #tpu.memory_space<vmem>>, vector<2x256xf32>
    tpu.vector_store %arg8[%c6_61, %c0_62], %102 {strides = array<i32>} : memref<18x256xf32, #tpu.memory_space<vmem>>, vector<2x256xf32>,
    %c8_63 = arith.constant 8 : index
    %c0_64 = arith.constant 0 : index
    %104 = vector.load %arg8[%c8_63, %c0_64] : memref<18x256xf32, #tpu.memory_space<vmem>>, vector<2x256xf32>
    tpu.vector_store %arg8[%c8_63, %c0_64], %79 {strides = array<i32>} : memref<18x256xf32, #tpu.memory_space<vmem>>, vector<2x256xf32>,
    %105 = vector.extract_strided_slice %79 {offsets = [0, 1], sizes = [2, 255], strides = [1, 1]} : vector<2x256xf32> to vector<2x255xf32>
    %106 = vector.extract_strided_slice %79 {offsets = [0, 0], sizes = [2, 1], strides = [1, 1]} : vector<2x256xf32> to vector<2x1xf32>
    %107 = tpu.concatenate %105, %106 in 1 : vector<2x255xf32>, vector<2x1xf32> -> vector<2x256xf32>
    %108 = vector.broadcast %4 : vector<1x256xf32> to vector<2x256xf32>
    %109 = arith.mulf %107, %108 : vector<2x256xf32>
    %c10_65 = arith.constant 10 : index
    %c0_66 = arith.constant 0 : index
    %110 = vector.load %arg8[%c10_65, %c0_66] : memref<18x256xf32, #tpu.memory_space<vmem>>, vector<2x256xf32>
    tpu.vector_store %arg8[%c10_65, %c0_66], %109 {strides = array<i32>} : memref<18x256xf32, #tpu.memory_space<vmem>>, vector<2x256xf32>,
    %111 = vector.extract_strided_slice %79 {offsets = [0, 15], sizes = [2, 241], strides = [1, 1]} : vector<2x256xf32> to vector<2x241xf32>
    %112 = vector.extract_strided_slice %79 {offsets = [0, 0], sizes = [2, 15], strides = [1, 1]} : vector<2x256xf32> to vector<2x15xf32>
    %113 = tpu.concatenate %111, %112 in 1 : vector<2x241xf32>, vector<2x15xf32> -> vector<2x256xf32>
    %114 = vector.broadcast %5 : vector<1x256xf32> to vector<2x256xf32>
    %115 = arith.mulf %113, %114 : vector<2x256xf32>
    %c12_67 = arith.constant 12 : index
    %c0_68 = arith.constant 0 : index
    %116 = vector.load %arg8[%c12_67, %c0_68] : memref<18x256xf32, #tpu.memory_space<vmem>>, vector<2x256xf32>
    tpu.vector_store %arg8[%c12_67, %c0_68], %115 {strides = array<i32>} : memref<18x256xf32, #tpu.memory_space<vmem>>, vector<2x256xf32>,
    %117 = vector.extract_strided_slice %79 {offsets = [0, 16], sizes = [2, 240], strides = [1, 1]} : vector<2x256xf32> to vector<2x240xf32>
    %118 = vector.extract_strided_slice %79 {offsets = [0, 0], sizes = [2, 16], strides = [1, 1]} : vector<2x256xf32> to vector<2x16xf32>
    %119 = tpu.concatenate %117, %118 in 1 : vector<2x240xf32>, vector<2x16xf32> -> vector<2x256xf32>
    %120 = vector.broadcast %6 : vector<1x256xf32> to vector<2x256xf32>
    %121 = arith.mulf %119, %120 : vector<2x256xf32>
    %c14_69 = arith.constant 14 : index
    %c0_70 = arith.constant 0 : index
    %122 = vector.load %arg8[%c14_69, %c0_70] : memref<18x256xf32, #tpu.memory_space<vmem>>, vector<2x256xf32>
    tpu.vector_store %arg8[%c14_69, %c0_70], %121 {strides = array<i32>} : memref<18x256xf32, #tpu.memory_space<vmem>>, vector<2x256xf32>,
    %123 = vector.extract_strided_slice %79 {offsets = [0, 17], sizes = [2, 239], strides = [1, 1]} : vector<2x256xf32> to vector<2x239xf32>
    %124 = vector.extract_strided_slice %79 {offsets = [0, 0], sizes = [2, 17], strides = [1, 1]} : vector<2x256xf32> to vector<2x17xf32>
    %125 = tpu.concatenate %123, %124 in 1 : vector<2x239xf32>, vector<2x17xf32> -> vector<2x256xf32>
    %126 = vector.broadcast %7 : vector<1x256xf32> to vector<2x256xf32>
    %127 = arith.mulf %125, %126 : vector<2x256xf32>
    %c16_71 = arith.constant 16 : index
    %c0_72 = arith.constant 0 : index
    %128 = vector.load %arg8[%c16_71, %c0_72] : memref<18x256xf32, #tpu.memory_space<vmem>>, vector<2x256xf32>
    tpu.vector_store %arg8[%c16_71, %c0_72], %127 {strides = array<i32>} : memref<18x256xf32, #tpu.memory_space<vmem>>, vector<2x256xf32>,
    %c0_73 = arith.constant 0 : index
    %c0_74 = arith.constant 0 : index
    %129 = vector.load %arg8[%c0_73, %c0_74] : memref<18x256xf32, #tpu.memory_space<vmem>>, vector<18x256xf32>
    %cst_75 = arith.constant dense<0.000000e+00> : vector<2x256xf32>
    %130 = tpu.matmul %11, %129, %cst_75 {dimension_numbers = #tpu.dot_dimension_numbers<[1], [0], [0], [1], [0, 0, 1, 1], [], []>} : vector<2x18xf32>, vector<18x256xf32>, vector<2x256xf32> -> vector<2x256xf32>
    %131 = vector.broadcast %17 : vector<2x1xf32> to vector<2x256xf32>
    %132 = arith.addf %130, %131 : vector<2x256xf32>
    %133 = vector.extract_strided_slice %132 {offsets = [0, 239], sizes = [2, 17], strides = [1, 1]} : vector<2x256xf32> to vector<2x17xf32>
    %134 = vector.extract_strided_slice %132 {offsets = [0, 0], sizes = [2, 239], strides = [1, 1]} : vector<2x256xf32> to vector<2x239xf32>
    %135 = tpu.concatenate %133, %134 in 1 : vector<2x17xf32>, vector<2x239xf32> -> vector<2x256xf32>
    %136 = vector.broadcast %0 : vector<1x256xf32> to vector<2x256xf32>
    %137 = arith.mulf %135, %136 : vector<2x256xf32>
    %c0_76 = arith.constant 0 : index
    %c0_77 = arith.constant 0 : index
    %138 = vector.load %arg8[%c0_76, %c0_77] : memref<18x256xf32, #tpu.memory_space<vmem>>, vector<2x256xf32>
    tpu.vector_store %arg8[%c0_76, %c0_77], %137 {strides = array<i32>} : memref<18x256xf32, #tpu.memory_space<vmem>>, vector<2x256xf32>,
    %139 = vector.extract_strided_slice %132 {offsets = [0, 240], sizes = [2, 16], strides = [1, 1]} : vector<2x256xf32> to vector<2x16xf32>
    %140 = vector.extract_strided_slice %132 {offsets = [0, 0], sizes = [2, 240], strides = [1, 1]} : vector<2x256xf32> to vector<2x240xf32>
    %141 = tpu.concatenate %139, %140 in 1 : vector<2x16xf32>, vector<2x240xf32> -> vector<2x256xf32>
    %142 = vector.broadcast %1 : vector<1x256xf32> to vector<2x256xf32>
    %143 = arith.mulf %141, %142 : vector<2x256xf32>
    %c2_78 = arith.constant 2 : index
    %c0_79 = arith.constant 0 : index
    %144 = vector.load %arg8[%c2_78, %c0_79] : memref<18x256xf32, #tpu.memory_space<vmem>>, vector<2x256xf32>
    tpu.vector_store %arg8[%c2_78, %c0_79], %143 {strides = array<i32>} : memref<18x256xf32, #tpu.memory_space<vmem>>, vector<2x256xf32>,
    %145 = vector.extract_strided_slice %132 {offsets = [0, 241], sizes = [2, 15], strides = [1, 1]} : vector<2x256xf32> to vector<2x15xf32>
    %146 = vector.extract_strided_slice %132 {offsets = [0, 0], sizes = [2, 241], strides = [1, 1]} : vector<2x256xf32> to vector<2x241xf32>
    %147 = tpu.concatenate %145, %146 in 1 : vector<2x15xf32>, vector<2x241xf32> -> vector<2x256xf32>
    %148 = vector.broadcast %2 : vector<1x256xf32> to vector<2x256xf32>
    %149 = arith.mulf %147, %148 : vector<2x256xf32>
    %c4_80 = arith.constant 4 : index
    %c0_81 = arith.constant 0 : index
    %150 = vector.load %arg8[%c4_80, %c0_81] : memref<18x256xf32, #tpu.memory_space<vmem>>, vector<2x256xf32>
    tpu.vector_store %arg8[%c4_80, %c0_81], %149 {strides = array<i32>} : memref<18x256xf32, #tpu.memory_space<vmem>>, vector<2x256xf32>,
    %151 = vector.extract_strided_slice %132 {offsets = [0, 255], sizes = [2, 1], strides = [1, 1]} : vector<2x256xf32> to vector<2x1xf32>
    %152 = vector.extract_strided_slice %132 {offsets = [0, 0], sizes = [2, 255], strides = [1, 1]} : vector<2x256xf32> to vector<2x255xf32>
    %153 = tpu.concatenate %151, %152 in 1 : vector<2x1xf32>, vector<2x255xf32> -> vector<2x256xf32>
    %154 = vector.broadcast %3 : vector<1x256xf32> to vector<2x256xf32>
    %155 = arith.mulf %153, %154 : vector<2x256xf32>
    %c6_82 = arith.constant 6 : index
    %c0_83 = arith.constant 0 : index
    %156 = vector.load %arg8[%c6_82, %c0_83] : memref<18x256xf32, #tpu.memory_space<vmem>>, vector<2x256xf32>
    tpu.vector_store %arg8[%c6_82, %c0_83], %155 {strides = array<i32>} : memref<18x256xf32, #tpu.memory_space<vmem>>, vector<2x256xf32>,
    %c8_84 = arith.constant 8 : index
    %c0_85 = arith.constant 0 : index
    %157 = vector.load %arg8[%c8_84, %c0_85] : memref<18x256xf32, #tpu.memory_space<vmem>>, vector<2x256xf32>
    tpu.vector_store %arg8[%c8_84, %c0_85], %132 {strides = array<i32>} : memref<18x256xf32, #tpu.memory_space<vmem>>, vector<2x256xf32>,
    %158 = vector.extract_strided_slice %132 {offsets = [0, 1], sizes = [2, 255], strides = [1, 1]} : vector<2x256xf32> to vector<2x255xf32>
    %159 = vector.extract_strided_slice %132 {offsets = [0, 0], sizes = [2, 1], strides = [1, 1]} : vector<2x256xf32> to vector<2x1xf32>
    %160 = tpu.concatenate %158, %159 in 1 : vector<2x255xf32>, vector<2x1xf32> -> vector<2x256xf32>
    %161 = vector.broadcast %4 : vector<1x256xf32> to vector<2x256xf32>
    %162 = arith.mulf %160, %161 : vector<2x256xf32>
    %c10_86 = arith.constant 10 : index
    %c0_87 = arith.constant 0 : index
    %163 = vector.load %arg8[%c10_86, %c0_87] : memref<18x256xf32, #tpu.memory_space<vmem>>, vector<2x256xf32>
    tpu.vector_store %arg8[%c10_86, %c0_87], %162 {strides = array<i32>} : memref<18x256xf32, #tpu.memory_space<vmem>>, vector<2x256xf32>,
    %164 = vector.extract_strided_slice %132 {offsets = [0, 15], sizes = [2, 241], strides = [1, 1]} : vector<2x256xf32> to vector<2x241xf32>
    %165 = vector.extract_strided_slice %132 {offsets = [0, 0], sizes = [2, 15], strides = [1, 1]} : vector<2x256xf32> to vector<2x15xf32>
    %166 = tpu.concatenate %164, %165 in 1 : vector<2x241xf32>, vector<2x15xf32> -> vector<2x256xf32>
    %167 = vector.broadcast %5 : vector<1x256xf32> to vector<2x256xf32>
    %168 = arith.mulf %166, %167 : vector<2x256xf32>
    %c12_88 = arith.constant 12 : index
    %c0_89 = arith.constant 0 : index
    %169 = vector.load %arg8[%c12_88, %c0_89] : memref<18x256xf32, #tpu.memory_space<vmem>>, vector<2x256xf32>
    tpu.vector_store %arg8[%c12_88, %c0_89], %168 {strides = array<i32>} : memref<18x256xf32, #tpu.memory_space<vmem>>, vector<2x256xf32>,
    %170 = vector.extract_strided_slice %132 {offsets = [0, 16], sizes = [2, 240], strides = [1, 1]} : vector<2x256xf32> to vector<2x240xf32>
    %171 = vector.extract_strided_slice %132 {offsets = [0, 0], sizes = [2, 16], strides = [1, 1]} : vector<2x256xf32> to vector<2x16xf32>
    %172 = tpu.concatenate %170, %171 in 1 : vector<2x240xf32>, vector<2x16xf32> -> vector<2x256xf32>
    %173 = vector.broadcast %6 : vector<1x256xf32> to vector<2x256xf32>
    %174 = arith.mulf %172, %173 : vector<2x256xf32>
    %c14_90 = arith.constant 14 : index
    %c0_91 = arith.constant 0 : index
    %175 = vector.load %arg8[%c14_90, %c0_91] : memref<18x256xf32, #tpu.memory_space<vmem>>, vector<2x256xf32>
    tpu.vector_store %arg8[%c14_90, %c0_91], %174 {strides = array<i32>} : memref<18x256xf32, #tpu.memory_space<vmem>>, vector<2x256xf32>,
    %176 = vector.extract_strided_slice %132 {offsets = [0, 17], sizes = [2, 239], strides = [1, 1]} : vector<2x256xf32> to vector<2x239xf32>
    %177 = vector.extract_strided_slice %132 {offsets = [0, 0], sizes = [2, 17], strides = [1, 1]} : vector<2x256xf32> to vector<2x17xf32>
    %178 = tpu.concatenate %176, %177 in 1 : vector<2x239xf32>, vector<2x17xf32> -> vector<2x256xf32>
    %179 = vector.broadcast %7 : vector<1x256xf32> to vector<2x256xf32>
    %180 = arith.mulf %178, %179 : vector<2x256xf32>
    %c16_92 = arith.constant 16 : index
    %c0_93 = arith.constant 0 : index
    %181 = vector.load %arg8[%c16_92, %c0_93] : memref<18x256xf32, #tpu.memory_space<vmem>>, vector<2x256xf32>
    tpu.vector_store %arg8[%c16_92, %c0_93], %180 {strides = array<i32>} : memref<18x256xf32, #tpu.memory_space<vmem>>, vector<2x256xf32>,
    %c0_94 = arith.constant 0 : index
    %c0_95 = arith.constant 0 : index
    %182 = vector.load %arg8[%c0_94, %c0_95] : memref<18x256xf32, #tpu.memory_space<vmem>>, vector<18x256xf32>
    %cst_96 = arith.constant dense<0.000000e+00> : vector<2x256xf32>
    %183 = tpu.matmul %13, %182, %cst_96 {dimension_numbers = #tpu.dot_dimension_numbers<[1], [0], [0], [1], [0, 0, 1, 1], [], []>} : vector<2x18xf32>, vector<18x256xf32>, vector<2x256xf32> -> vector<2x256xf32>
    %184 = vector.broadcast %19 : vector<2x1xf32> to vector<2x256xf32>
    %185 = arith.addf %183, %184 : vector<2x256xf32>
    %cst_97 = arith.constant dense<0.000000e+00> : vector<8x256xf32>
    %186 = tpu.matmul %20, %185, %cst_97 {dimension_numbers = #tpu.dot_dimension_numbers<[1], [0], [0], [1], [0, 0, 1, 1], [], []>} : vector<8x2xf32>, vector<2x256xf32>, vector<8x256xf32> -> vector<8x256xf32>
    %cst_98 = arith.constant dense<0.000000e+00> : vector<8x256xf32>
    %187 = tpu.matmul %21, %26, %cst_98 {dimension_numbers = #tpu.dot_dimension_numbers<[1], [0], [0], [1], [0, 0, 1, 1], [], []>} : vector<8x2xf32>, vector<2x256xf32>, vector<8x256xf32> -> vector<8x256xf32>
    %188 = arith.addf %186, %187 : vector<8x256xf32>
    %189 = vector.broadcast %22 : vector<8x1xf32> to vector<8x256xf32>
    %190 = arith.addf %188, %189 : vector<8x256xf32>
    %c0_99 = arith.constant 0 : index
    %c0_100 = arith.constant 0 : index
    %c0_101 = arith.constant 0 : index
    %191 = vector.load %arg7[%c0_99, %c0_100, %c0_101] : memref<2x8x256xf32, #tpu.memory_space<vmem>>, vector<1x8x256xf32>
    %192 = vector.shape_cast %191 : vector<1x8x256xf32> to vector<8x256xf32>
    %193 = vector.shape_cast %190 : vector<8x256xf32> to vector<1x8x256xf32>
    tpu.vector_store %arg7[%c0_99, %c0_100, %c0_101], %193 {strides = array<i32>} : memref<2x8x256xf32, #tpu.memory_space<vmem>>, vector<1x8x256xf32>,
    %c1_102 = arith.constant 1 : index
    %c0_103 = arith.constant 0 : index
    %c0_104 = arith.constant 0 : index
    %c0_105 = arith.constant 0 : index
    %194 = vector.load %arg2[%c1_102, %c0_103, %c0_104, %c0_105] : memref<2x2x2x256xf32, #tpu.memory_space<vmem>>, vector<1x1x2x256xf32>
    %195 = vector.shape_cast %194 : vector<1x1x2x256xf32> to vector<2x256xf32>
    %c1_106 = arith.constant 1 : index
    %c1_107 = arith.constant 1 : index
    %c0_108 = arith.constant 0 : index
    %c0_109 = arith.constant 0 : index
    %196 = vector.load %arg2[%c1_106, %c1_107, %c0_108, %c0_109] : memref<2x2x2x256xf32, #tpu.memory_space<vmem>>, vector<1x1x2x256xf32>
    %197 = vector.shape_cast %196 : vector<1x1x2x256xf32> to vector<2x256xf32>
    %198 = vector.extract_strided_slice %195 {offsets = [0, 239], sizes = [2, 17], strides = [1, 1]} : vector<2x256xf32> to vector<2x17xf32>
    %199 = vector.extract_strided_slice %195 {offsets = [0, 0], sizes = [2, 239], strides = [1, 1]} : vector<2x256xf32> to vector<2x239xf32>
    %200 = tpu.concatenate %198, %199 in 1 : vector<2x17xf32>, vector<2x239xf32> -> vector<2x256xf32>
    %201 = vector.broadcast %0 : vector<1x256xf32> to vector<2x256xf32>
    %202 = arith.mulf %200, %201 : vector<2x256xf32>
    %c0_110 = arith.constant 0 : index
    %c0_111 = arith.constant 0 : index
    %203 = vector.load %arg8[%c0_110, %c0_111] : memref<18x256xf32, #tpu.memory_space<vmem>>, vector<2x256xf32>
    tpu.vector_store %arg8[%c0_110, %c0_111], %202 {strides = array<i32>} : memref<18x256xf32, #tpu.memory_space<vmem>>, vector<2x256xf32>,
    %204 = vector.extract_strided_slice %195 {offsets = [0, 240], sizes = [2, 16], strides = [1, 1]} : vector<2x256xf32> to vector<2x16xf32>
    %205 = vector.extract_strided_slice %195 {offsets = [0, 0], sizes = [2, 240], strides = [1, 1]} : vector<2x256xf32> to vector<2x240xf32>
    %206 = tpu.concatenate %204, %205 in 1 : vector<2x16xf32>, vector<2x240xf32> -> vector<2x256xf32>
    %207 = vector.broadcast %1 : vector<1x256xf32> to vector<2x256xf32>
    %208 = arith.mulf %206, %207 : vector<2x256xf32>
    %c2_112 = arith.constant 2 : index
    %c0_113 = arith.constant 0 : index
    %209 = vector.load %arg8[%c2_112, %c0_113] : memref<18x256xf32, #tpu.memory_space<vmem>>, vector<2x256xf32>
    tpu.vector_store %arg8[%c2_112, %c0_113], %208 {strides = array<i32>} : memref<18x256xf32, #tpu.memory_space<vmem>>, vector<2x256xf32>,
    %210 = vector.extract_strided_slice %195 {offsets = [0, 241], sizes = [2, 15], strides = [1, 1]} : vector<2x256xf32> to vector<2x15xf32>
    %211 = vector.extract_strided_slice %195 {offsets = [0, 0], sizes = [2, 241], strides = [1, 1]} : vector<2x256xf32> to vector<2x241xf32>
    %212 = tpu.concatenate %210, %211 in 1 : vector<2x15xf32>, vector<2x241xf32> -> vector<2x256xf32>
    %213 = vector.broadcast %2 : vector<1x256xf32> to vector<2x256xf32>
    %214 = arith.mulf %212, %213 : vector<2x256xf32>
    %c4_114 = arith.constant 4 : index
    %c0_115 = arith.constant 0 : index
    %215 = vector.load %arg8[%c4_114, %c0_115] : memref<18x256xf32, #tpu.memory_space<vmem>>, vector<2x256xf32>
    tpu.vector_store %arg8[%c4_114, %c0_115], %214 {strides = array<i32>} : memref<18x256xf32, #tpu.memory_space<vmem>>, vector<2x256xf32>,
    %216 = vector.extract_strided_slice %195 {offsets = [0, 255], sizes = [2, 1], strides = [1, 1]} : vector<2x256xf32> to vector<2x1xf32>
    %217 = vector.extract_strided_slice %195 {offsets = [0, 0], sizes = [2, 255], strides = [1, 1]} : vector<2x256xf32> to vector<2x255xf32>
    %218 = tpu.concatenate %216, %217 in 1 : vector<2x1xf32>, vector<2x255xf32> -> vector<2x256xf32>
    %219 = vector.broadcast %3 : vector<1x256xf32> to vector<2x256xf32>
    %220 = arith.mulf %218, %219 : vector<2x256xf32>
    %c6_116 = arith.constant 6 : index
    %c0_117 = arith.constant 0 : index
    %221 = vector.load %arg8[%c6_116, %c0_117] : memref<18x256xf32, #tpu.memory_space<vmem>>, vector<2x256xf32>
    tpu.vector_store %arg8[%c6_116, %c0_117], %220 {strides = array<i32>} : memref<18x256xf32, #tpu.memory_space<vmem>>, vector<2x256xf32>,
    %c8_118 = arith.constant 8 : index
    %c0_119 = arith.constant 0 : index
    %222 = vector.load %arg8[%c8_118, %c0_119] : memref<18x256xf32, #tpu.memory_space<vmem>>, vector<2x256xf32>
    tpu.vector_store %arg8[%c8_118, %c0_119], %195 {strides = array<i32>} : memref<18x256xf32, #tpu.memory_space<vmem>>, vector<2x256xf32>,
    %223 = vector.extract_strided_slice %195 {offsets = [0, 1], sizes = [2, 255], strides = [1, 1]} : vector<2x256xf32> to vector<2x255xf32>
    %224 = vector.extract_strided_slice %195 {offsets = [0, 0], sizes = [2, 1], strides = [1, 1]} : vector<2x256xf32> to vector<2x1xf32>
    %225 = tpu.concatenate %223, %224 in 1 : vector<2x255xf32>, vector<2x1xf32> -> vector<2x256xf32>
    %226 = vector.broadcast %4 : vector<1x256xf32> to vector<2x256xf32>
    %227 = arith.mulf %225, %226 : vector<2x256xf32>
    %c10_120 = arith.constant 10 : index
    %c0_121 = arith.constant 0 : index
    %228 = vector.load %arg8[%c10_120, %c0_121] : memref<18x256xf32, #tpu.memory_space<vmem>>, vector<2x256xf32>
    tpu.vector_store %arg8[%c10_120, %c0_121], %227 {strides = array<i32>} : memref<18x256xf32, #tpu.memory_space<vmem>>, vector<2x256xf32>,
    %229 = vector.extract_strided_slice %195 {offsets = [0, 15], sizes = [2, 241], strides = [1, 1]} : vector<2x256xf32> to vector<2x241xf32>
    %230 = vector.extract_strided_slice %195 {offsets = [0, 0], sizes = [2, 15], strides = [1, 1]} : vector<2x256xf32> to vector<2x15xf32>
    %231 = tpu.concatenate %229, %230 in 1 : vector<2x241xf32>, vector<2x15xf32> -> vector<2x256xf32>
    %232 = vector.broadcast %5 : vector<1x256xf32> to vector<2x256xf32>
    %233 = arith.mulf %231, %232 : vector<2x256xf32>
    %c12_122 = arith.constant 12 : index
    %c0_123 = arith.constant 0 : index
    %234 = vector.load %arg8[%c12_122, %c0_123] : memref<18x256xf32, #tpu.memory_space<vmem>>, vector<2x256xf32>
    tpu.vector_store %arg8[%c12_122, %c0_123], %233 {strides = array<i32>} : memref<18x256xf32, #tpu.memory_space<vmem>>, vector<2x256xf32>,
    %235 = vector.extract_strided_slice %195 {offsets = [0, 16], sizes = [2, 240], strides = [1, 1]} : vector<2x256xf32> to vector<2x240xf32>
    %236 = vector.extract_strided_slice %195 {offsets = [0, 0], sizes = [2, 16], strides = [1, 1]} : vector<2x256xf32> to vector<2x16xf32>
    %237 = tpu.concatenate %235, %236 in 1 : vector<2x240xf32>, vector<2x16xf32> -> vector<2x256xf32>
    %238 = vector.broadcast %6 : vector<1x256xf32> to vector<2x256xf32>
    %239 = arith.mulf %237, %238 : vector<2x256xf32>
    %c14_124 = arith.constant 14 : index
    %c0_125 = arith.constant 0 : index
    %240 = vector.load %arg8[%c14_124, %c0_125] : memref<18x256xf32, #tpu.memory_space<vmem>>, vector<2x256xf32>
    tpu.vector_store %arg8[%c14_124, %c0_125], %239 {strides = array<i32>} : memref<18x256xf32, #tpu.memory_space<vmem>>, vector<2x256xf32>,
    %241 = vector.extract_strided_slice %195 {offsets = [0, 17], sizes = [2, 239], strides = [1, 1]} : vector<2x256xf32> to vector<2x239xf32>
    %242 = vector.extract_strided_slice %195 {offsets = [0, 0], sizes = [2, 17], strides = [1, 1]} : vector<2x256xf32> to vector<2x17xf32>
    %243 = tpu.concatenate %241, %242 in 1 : vector<2x239xf32>, vector<2x17xf32> -> vector<2x256xf32>
    %244 = vector.broadcast %7 : vector<1x256xf32> to vector<2x256xf32>
    %245 = arith.mulf %243, %244 : vector<2x256xf32>
    %c16_126 = arith.constant 16 : index
    %c0_127 = arith.constant 0 : index
    %246 = vector.load %arg8[%c16_126, %c0_127] : memref<18x256xf32, #tpu.memory_space<vmem>>, vector<2x256xf32>
    tpu.vector_store %arg8[%c16_126, %c0_127], %245 {strides = array<i32>} : memref<18x256xf32, #tpu.memory_space<vmem>>, vector<2x256xf32>,
    %c0_128 = arith.constant 0 : index
    %c0_129 = arith.constant 0 : index
    %247 = vector.load %arg8[%c0_128, %c0_129] : memref<18x256xf32, #tpu.memory_space<vmem>>, vector<18x256xf32>
    %cst_130 = arith.constant dense<0.000000e+00> : vector<2x256xf32>
    %248 = tpu.matmul %9, %247, %cst_130 {dimension_numbers = #tpu.dot_dimension_numbers<[1], [0], [0], [1], [0, 0, 1, 1], [], []>} : vector<2x18xf32>, vector<18x256xf32>, vector<2x256xf32> -> vector<2x256xf32>
    %249 = vector.broadcast %15 : vector<2x1xf32> to vector<2x256xf32>
    %250 = arith.addf %248, %249 : vector<2x256xf32>
    %251 = vector.extract_strided_slice %250 {offsets = [0, 239], sizes = [2, 17], strides = [1, 1]} : vector<2x256xf32> to vector<2x17xf32>
    %252 = vector.extract_strided_slice %250 {offsets = [0, 0], sizes = [2, 239], strides = [1, 1]} : vector<2x256xf32> to vector<2x239xf32>
    %253 = tpu.concatenate %251, %252 in 1 : vector<2x17xf32>, vector<2x239xf32> -> vector<2x256xf32>
    %254 = vector.broadcast %0 : vector<1x256xf32> to vector<2x256xf32>
    %255 = arith.mulf %253, %254 : vector<2x256xf32>
    %c0_131 = arith.constant 0 : index
    %c0_132 = arith.constant 0 : index
    %256 = vector.load %arg8[%c0_131, %c0_132] : memref<18x256xf32, #tpu.memory_space<vmem>>, vector<2x256xf32>
    tpu.vector_store %arg8[%c0_131, %c0_132], %255 {strides = array<i32>} : memref<18x256xf32, #tpu.memory_space<vmem>>, vector<2x256xf32>,
    %257 = vector.extract_strided_slice %250 {offsets = [0, 240], sizes = [2, 16], strides = [1, 1]} : vector<2x256xf32> to vector<2x16xf32>
    %258 = vector.extract_strided_slice %250 {offsets = [0, 0], sizes = [2, 240], strides = [1, 1]} : vector<2x256xf32> to vector<2x240xf32>
    %259 = tpu.concatenate %257, %258 in 1 : vector<2x16xf32>, vector<2x240xf32> -> vector<2x256xf32>
    %260 = vector.broadcast %1 : vector<1x256xf32> to vector<2x256xf32>
    %261 = arith.mulf %259, %260 : vector<2x256xf32>
    %c2_133 = arith.constant 2 : index
    %c0_134 = arith.constant 0 : index
    %262 = vector.load %arg8[%c2_133, %c0_134] : memref<18x256xf32, #tpu.memory_space<vmem>>, vector<2x256xf32>
    tpu.vector_store %arg8[%c2_133, %c0_134], %261 {strides = array<i32>} : memref<18x256xf32, #tpu.memory_space<vmem>>, vector<2x256xf32>,
    %263 = vector.extract_strided_slice %250 {offsets = [0, 241], sizes = [2, 15], strides = [1, 1]} : vector<2x256xf32> to vector<2x15xf32>
    %264 = vector.extract_strided_slice %250 {offsets = [0, 0], sizes = [2, 241], strides = [1, 1]} : vector<2x256xf32> to vector<2x241xf32>
    %265 = tpu.concatenate %263, %264 in 1 : vector<2x15xf32>, vector<2x241xf32> -> vector<2x256xf32>
    %266 = vector.broadcast %2 : vector<1x256xf32> to vector<2x256xf32>
    %267 = arith.mulf %265, %266 : vector<2x256xf32>
    %c4_135 = arith.constant 4 : index
    %c0_136 = arith.constant 0 : index
    %268 = vector.load %arg8[%c4_135, %c0_136] : memref<18x256xf32, #tpu.memory_space<vmem>>, vector<2x256xf32>
    tpu.vector_store %arg8[%c4_135, %c0_136], %267 {strides = array<i32>} : memref<18x256xf32, #tpu.memory_space<vmem>>, vector<2x256xf32>,
    %269 = vector.extract_strided_slice %250 {offsets = [0, 255], sizes = [2, 1], strides = [1, 1]} : vector<2x256xf32> to vector<2x1xf32>
    %270 = vector.extract_strided_slice %250 {offsets = [0, 0], sizes = [2, 255], strides = [1, 1]} : vector<2x256xf32> to vector<2x255xf32>
    %271 = tpu.concatenate %269, %270 in 1 : vector<2x1xf32>, vector<2x255xf32> -> vector<2x256xf32>
    %272 = vector.broadcast %3 : vector<1x256xf32> to vector<2x256xf32>
    %273 = arith.mulf %271, %272 : vector<2x256xf32>
    %c6_137 = arith.constant 6 : index
    %c0_138 = arith.constant 0 : index
    %274 = vector.load %arg8[%c6_137, %c0_138] : memref<18x256xf32, #tpu.memory_space<vmem>>, vector<2x256xf32>
    tpu.vector_store %arg8[%c6_137, %c0_138], %273 {strides = array<i32>} : memref<18x256xf32, #tpu.memory_space<vmem>>, vector<2x256xf32>,
    %c8_139 = arith.constant 8 : index
    %c0_140 = arith.constant 0 : index
    %275 = vector.load %arg8[%c8_139, %c0_140] : memref<18x256xf32, #tpu.memory_space<vmem>>, vector<2x256xf32>
    tpu.vector_store %arg8[%c8_139, %c0_140], %250 {strides = array<i32>} : memref<18x256xf32, #tpu.memory_space<vmem>>, vector<2x256xf32>,
    %276 = vector.extract_strided_slice %250 {offsets = [0, 1], sizes = [2, 255], strides = [1, 1]} : vector<2x256xf32> to vector<2x255xf32>
    %277 = vector.extract_strided_slice %250 {offsets = [0, 0], sizes = [2, 1], strides = [1, 1]} : vector<2x256xf32> to vector<2x1xf32>
    %278 = tpu.concatenate %276, %277 in 1 : vector<2x255xf32>, vector<2x1xf32> -> vector<2x256xf32>
    %279 = vector.broadcast %4 : vector<1x256xf32> to vector<2x256xf32>
    %280 = arith.mulf %278, %279 : vector<2x256xf32>
    %c10_141 = arith.constant 10 : index
    %c0_142 = arith.constant 0 : index
    %281 = vector.load %arg8[%c10_141, %c0_142] : memref<18x256xf32, #tpu.memory_space<vmem>>, vector<2x256xf32>
    tpu.vector_store %arg8[%c10_141, %c0_142], %280 {strides = array<i32>} : memref<18x256xf32, #tpu.memory_space<vmem>>, vector<2x256xf32>,
    %282 = vector.extract_strided_slice %250 {offsets = [0, 15], sizes = [2, 241], strides = [1, 1]} : vector<2x256xf32> to vector<2x241xf32>
    %283 = vector.extract_strided_slice %250 {offsets = [0, 0], sizes = [2, 15], strides = [1, 1]} : vector<2x256xf32> to vector<2x15xf32>
    %284 = tpu.concatenate %282, %283 in 1 : vector<2x241xf32>, vector<2x15xf32> -> vector<2x256xf32>
    %285 = vector.broadcast %5 : vector<1x256xf32> to vector<2x256xf32>
    %286 = arith.mulf %284, %285 : vector<2x256xf32>
    %c12_143 = arith.constant 12 : index
    %c0_144 = arith.constant 0 : index
    %287 = vector.load %arg8[%c12_143, %c0_144] : memref<18x256xf32, #tpu.memory_space<vmem>>, vector<2x256xf32>
    tpu.vector_store %arg8[%c12_143, %c0_144], %286 {strides = array<i32>} : memref<18x256xf32, #tpu.memory_space<vmem>>, vector<2x256xf32>,
    %288 = vector.extract_strided_slice %250 {offsets = [0, 16], sizes = [2, 240], strides = [1, 1]} : vector<2x256xf32> to vector<2x240xf32>
    %289 = vector.extract_strided_slice %250 {offsets = [0, 0], sizes = [2, 16], strides = [1, 1]} : vector<2x256xf32> to vector<2x16xf32>
    %290 = tpu.concatenate %288, %289 in 1 : vector<2x240xf32>, vector<2x16xf32> -> vector<2x256xf32>
    %291 = vector.broadcast %6 : vector<1x256xf32> to vector<2x256xf32>
    %292 = arith.mulf %290, %291 : vector<2x256xf32>
    %c14_145 = arith.constant 14 : index
    %c0_146 = arith.constant 0 : index
    %293 = vector.load %arg8[%c14_145, %c0_146] : memref<18x256xf32, #tpu.memory_space<vmem>>, vector<2x256xf32>
    tpu.vector_store %arg8[%c14_145, %c0_146], %292 {strides = array<i32>} : memref<18x256xf32, #tpu.memory_space<vmem>>, vector<2x256xf32>,
    %294 = vector.extract_strided_slice %250 {offsets = [0, 17], sizes = [2, 239], strides = [1, 1]} : vector<2x256xf32> to vector<2x239xf32>
    %295 = vector.extract_strided_slice %250 {offsets = [0, 0], sizes = [2, 17], strides = [1, 1]} : vector<2x256xf32> to vector<2x17xf32>
    %296 = tpu.concatenate %294, %295 in 1 : vector<2x239xf32>, vector<2x17xf32> -> vector<2x256xf32>
    %297 = vector.broadcast %7 : vector<1x256xf32> to vector<2x256xf32>
    %298 = arith.mulf %296, %297 : vector<2x256xf32>
    %c16_147 = arith.constant 16 : index
    %c0_148 = arith.constant 0 : index
    %299 = vector.load %arg8[%c16_147, %c0_148] : memref<18x256xf32, #tpu.memory_space<vmem>>, vector<2x256xf32>
    tpu.vector_store %arg8[%c16_147, %c0_148], %298 {strides = array<i32>} : memref<18x256xf32, #tpu.memory_space<vmem>>, vector<2x256xf32>,
    %c0_149 = arith.constant 0 : index
    %c0_150 = arith.constant 0 : index
    %300 = vector.load %arg8[%c0_149, %c0_150] : memref<18x256xf32, #tpu.memory_space<vmem>>, vector<18x256xf32>
    %cst_151 = arith.constant dense<0.000000e+00> : vector<2x256xf32>
    %301 = tpu.matmul %11, %300, %cst_151 {dimension_numbers = #tpu.dot_dimension_numbers<[1], [0], [0], [1], [0, 0, 1, 1], [], []>} : vector<2x18xf32>, vector<18x256xf32>, vector<2x256xf32> -> vector<2x256xf32>
    %302 = vector.broadcast %17 : vector<2x1xf32> to vector<2x256xf32>
    %303 = arith.addf %301, %302 : vector<2x256xf32>
    %304 = vector.extract_strided_slice %303 {offsets = [0, 239], sizes = [2, 17], strides = [1, 1]} : vector<2x256xf32> to vector<2x17xf32>
    %305 = vector.extract_strided_slice %303 {offsets = [0, 0], sizes = [2, 239], strides = [1, 1]} : vector<2x256xf32> to vector<2x239xf32>
    %306 = tpu.concatenate %304, %305 in 1 : vector<2x17xf32>, vector<2x239xf32> -> vector<2x256xf32>
    %307 = vector.broadcast %0 : vector<1x256xf32> to vector<2x256xf32>
    %308 = arith.mulf %306, %307 : vector<2x256xf32>
    %c0_152 = arith.constant 0 : index
    %c0_153 = arith.constant 0 : index
    %309 = vector.load %arg8[%c0_152, %c0_153] : memref<18x256xf32, #tpu.memory_space<vmem>>, vector<2x256xf32>
    tpu.vector_store %arg8[%c0_152, %c0_153], %308 {strides = array<i32>} : memref<18x256xf32, #tpu.memory_space<vmem>>, vector<2x256xf32>,
    %310 = vector.extract_strided_slice %303 {offsets = [0, 240], sizes = [2, 16], strides = [1, 1]} : vector<2x256xf32> to vector<2x16xf32>
    %311 = vector.extract_strided_slice %303 {offsets = [0, 0], sizes = [2, 240], strides = [1, 1]} : vector<2x256xf32> to vector<2x240xf32>
    %312 = tpu.concatenate %310, %311 in 1 : vector<2x16xf32>, vector<2x240xf32> -> vector<2x256xf32>
    %313 = vector.broadcast %1 : vector<1x256xf32> to vector<2x256xf32>
    %314 = arith.mulf %312, %313 : vector<2x256xf32>
    %c2_154 = arith.constant 2 : index
    %c0_155 = arith.constant 0 : index
    %315 = vector.load %arg8[%c2_154, %c0_155] : memref<18x256xf32, #tpu.memory_space<vmem>>, vector<2x256xf32>
    tpu.vector_store %arg8[%c2_154, %c0_155], %314 {strides = array<i32>} : memref<18x256xf32, #tpu.memory_space<vmem>>, vector<2x256xf32>,
    %316 = vector.extract_strided_slice %303 {offsets = [0, 241], sizes = [2, 15], strides = [1, 1]} : vector<2x256xf32> to vector<2x15xf32>
    %317 = vector.extract_strided_slice %303 {offsets = [0, 0], sizes = [2, 241], strides = [1, 1]} : vector<2x256xf32> to vector<2x241xf32>
    %318 = tpu.concatenate %316, %317 in 1 : vector<2x15xf32>, vector<2x241xf32> -> vector<2x256xf32>
    %319 = vector.broadcast %2 : vector<1x256xf32> to vector<2x256xf32>
    %320 = arith.mulf %318, %319 : vector<2x256xf32>
    %c4_156 = arith.constant 4 : index
    %c0_157 = arith.constant 0 : index
    %321 = vector.load %arg8[%c4_156, %c0_157] : memref<18x256xf32, #tpu.memory_space<vmem>>, vector<2x256xf32>
    tpu.vector_store %arg8[%c4_156, %c0_157], %320 {strides = array<i32>} : memref<18x256xf32, #tpu.memory_space<vmem>>, vector<2x256xf32>,
    %322 = vector.extract_strided_slice %303 {offsets = [0, 255], sizes = [2, 1], strides = [1, 1]} : vector<2x256xf32> to vector<2x1xf32>
    %323 = vector.extract_strided_slice %303 {offsets = [0, 0], sizes = [2, 255], strides = [1, 1]} : vector<2x256xf32> to vector<2x255xf32>
    %324 = tpu.concatenate %322, %323 in 1 : vector<2x1xf32>, vector<2x255xf32> -> vector<2x256xf32>
    %325 = vector.broadcast %3 : vector<1x256xf32> to vector<2x256xf32>
    %326 = arith.mulf %324, %325 : vector<2x256xf32>
    %c6_158 = arith.constant 6 : index
    %c0_159 = arith.constant 0 : index
    %327 = vector.load %arg8[%c6_158, %c0_159] : memref<18x256xf32, #tpu.memory_space<vmem>>, vector<2x256xf32>
    tpu.vector_store %arg8[%c6_158, %c0_159], %326 {strides = array<i32>} : memref<18x256xf32, #tpu.memory_space<vmem>>, vector<2x256xf32>,
    %c8_160 = arith.constant 8 : index
    %c0_161 = arith.constant 0 : index
    %328 = vector.load %arg8[%c8_160, %c0_161] : memref<18x256xf32, #tpu.memory_space<vmem>>, vector<2x256xf32>
    tpu.vector_store %arg8[%c8_160, %c0_161], %303 {strides = array<i32>} : memref<18x256xf32, #tpu.memory_space<vmem>>, vector<2x256xf32>,
    %329 = vector.extract_strided_slice %303 {offsets = [0, 1], sizes = [2, 255], strides = [1, 1]} : vector<2x256xf32> to vector<2x255xf32>
    %330 = vector.extract_strided_slice %303 {offsets = [0, 0], sizes = [2, 1], strides = [1, 1]} : vector<2x256xf32> to vector<2x1xf32>
    %331 = tpu.concatenate %329, %330 in 1 : vector<2x255xf32>, vector<2x1xf32> -> vector<2x256xf32>
    %332 = vector.broadcast %4 : vector<1x256xf32> to vector<2x256xf32>
    %333 = arith.mulf %331, %332 : vector<2x256xf32>
    %c10_162 = arith.constant 10 : index
    %c0_163 = arith.constant 0 : index
    %334 = vector.load %arg8[%c10_162, %c0_163] : memref<18x256xf32, #tpu.memory_space<vmem>>, vector<2x256xf32>
    tpu.vector_store %arg8[%c10_162, %c0_163], %333 {strides = array<i32>} : memref<18x256xf32, #tpu.memory_space<vmem>>, vector<2x256xf32>,
    %335 = vector.extract_strided_slice %303 {offsets = [0, 15], sizes = [2, 241], strides = [1, 1]} : vector<2x256xf32> to vector<2x241xf32>
    %336 = vector.extract_strided_slice %303 {offsets = [0, 0], sizes = [2, 15], strides = [1, 1]} : vector<2x256xf32> to vector<2x15xf32>
    %337 = tpu.concatenate %335, %336 in 1 : vector<2x241xf32>, vector<2x15xf32> -> vector<2x256xf32>
    %338 = vector.broadcast %5 : vector<1x256xf32> to vector<2x256xf32>
    %339 = arith.mulf %337, %338 : vector<2x256xf32>
    %c12_164 = arith.constant 12 : index
    %c0_165 = arith.constant 0 : index
    %340 = vector.load %arg8[%c12_164, %c0_165] : memref<18x256xf32, #tpu.memory_space<vmem>>, vector<2x256xf32>
    tpu.vector_store %arg8[%c12_164, %c0_165], %339 {strides = array<i32>} : memref<18x256xf32, #tpu.memory_space<vmem>>, vector<2x256xf32>,
    %341 = vector.extract_strided_slice %303 {offsets = [0, 16], sizes = [2, 240], strides = [1, 1]} : vector<2x256xf32> to vector<2x240xf32>
    %342 = vector.extract_strided_slice %303 {offsets = [0, 0], sizes = [2, 16], strides = [1, 1]} : vector<2x256xf32> to vector<2x16xf32>
    %343 = tpu.concatenate %341, %342 in 1 : vector<2x240xf32>, vector<2x16xf32> -> vector<2x256xf32>
    %344 = vector.broadcast %6 : vector<1x256xf32> to vector<2x256xf32>
    %345 = arith.mulf %343, %344 : vector<2x256xf32>
    %c14_166 = arith.constant 14 : index
    %c0_167 = arith.constant 0 : index
    %346 = vector.load %arg8[%c14_166, %c0_167] : memref<18x256xf32, #tpu.memory_space<vmem>>, vector<2x256xf32>
    tpu.vector_store %arg8[%c14_166, %c0_167], %345 {strides = array<i32>} : memref<18x256xf32, #tpu.memory_space<vmem>>, vector<2x256xf32>,
    %347 = vector.extract_strided_slice %303 {offsets = [0, 17], sizes = [2, 239], strides = [1, 1]} : vector<2x256xf32> to vector<2x239xf32>
    %348 = vector.extract_strided_slice %303 {offsets = [0, 0], sizes = [2, 17], strides = [1, 1]} : vector<2x256xf32> to vector<2x17xf32>
    %349 = tpu.concatenate %347, %348 in 1 : vector<2x239xf32>, vector<2x17xf32> -> vector<2x256xf32>
    %350 = vector.broadcast %7 : vector<1x256xf32> to vector<2x256xf32>
    %351 = arith.mulf %349, %350 : vector<2x256xf32>
    %c16_168 = arith.constant 16 : index
    %c0_169 = arith.constant 0 : index
    %352 = vector.load %arg8[%c16_168, %c0_169] : memref<18x256xf32, #tpu.memory_space<vmem>>, vector<2x256xf32>
    tpu.vector_store %arg8[%c16_168, %c0_169], %351 {strides = array<i32>} : memref<18x256xf32, #tpu.memory_space<vmem>>, vector<2x256xf32>,
    %c0_170 = arith.constant 0 : index
    %c0_171 = arith.constant 0 : index
    %353 = vector.load %arg8[%c0_170, %c0_171] : memref<18x256xf32, #tpu.memory_space<vmem>>, vector<18x256xf32>
    %cst_172 = arith.constant dense<0.000000e+00> : vector<2x256xf32>
    %354 = tpu.matmul %13, %353, %cst_172 {dimension_numbers = #tpu.dot_dimension_numbers<[1], [0], [0], [1], [0, 0, 1, 1], [], []>} : vector<2x18xf32>, vector<18x256xf32>, vector<2x256xf32> -> vector<2x256xf32>
    %355 = vector.broadcast %19 : vector<2x1xf32> to vector<2x256xf32>
    %356 = arith.addf %354, %355 : vector<2x256xf32>
    %cst_173 = arith.constant dense<0.000000e+00> : vector<8x256xf32>
    %357 = tpu.matmul %20, %356, %cst_173 {dimension_numbers = #tpu.dot_dimension_numbers<[1], [0], [0], [1], [0, 0, 1, 1], [], []>} : vector<8x2xf32>, vector<2x256xf32>, vector<8x256xf32> -> vector<8x256xf32>
    %cst_174 = arith.constant dense<0.000000e+00> : vector<8x256xf32>
    %358 = tpu.matmul %21, %197, %cst_174 {dimension_numbers = #tpu.dot_dimension_numbers<[1], [0], [0], [1], [0, 0, 1, 1], [], []>} : vector<8x2xf32>, vector<2x256xf32>, vector<8x256xf32> -> vector<8x256xf32>
    %359 = arith.addf %357, %358 : vector<8x256xf32>
    %360 = vector.broadcast %22 : vector<8x1xf32> to vector<8x256xf32>
    %361 = arith.addf %359, %360 : vector<8x256xf32>
    %c1_175 = arith.constant 1 : index
    %c0_176 = arith.constant 0 : index
    %c0_177 = arith.constant 0 : index
    %362 = vector.load %arg7[%c1_175, %c0_176, %c0_177] : memref<2x8x256xf32, #tpu.memory_space<vmem>>, vector<1x8x256xf32>
    %363 = vector.shape_cast %362 : vector<1x8x256xf32> to vector<8x256xf32>
    %364 = vector.shape_cast %361 : vector<8x256xf32> to vector<1x8x256xf32>
    tpu.vector_store %arg7[%c1_175, %c0_176, %c0_177], %364 {strides = array<i32>} : memref<2x8x256xf32, #tpu.memory_space<vmem>>, vector<1x8x256xf32>,
    return
  }
  func.func @transform_0(%arg0: i32) -> (i32, i32) {
    %c0_i32 = arith.constant 0 : i32
    %c0_i32_0 = arith.constant 0 : i32
    %c0_i32_1 = arith.constant 0 : i32
    return %c0_i32, %c0_i32_0 : i32, i32
  }
  func.func @transform_1(%arg0: i32) -> (i32, i32, i32, i32) {
    %c0_i32 = arith.constant 0 : i32
    %c0_i32_0 = arith.constant 0 : i32
    %c0_i32_1 = arith.constant 0 : i32
    %c0_i32_2 = arith.constant 0 : i32
    return %arg0, %c0_i32, %c0_i32_0, %c0_i32_1 : i32, i32, i32, i32
  }
  func.func @transform_2(%arg0: i32) -> (i32, i32, i32) {
    %c0_i32 = arith.constant 0 : i32
    %c0_i32_0 = arith.constant 0 : i32
    %c0_i32_1 = arith.constant 0 : i32
    %c0_i32_2 = arith.constant 0 : i32
    return %c0_i32, %c0_i32_0, %c0_i32_1 : i32, i32, i32
  }
  func.func @transform_3(%arg0: i32) -> (i32, i32, i32) {
    %c0_i32 = arith.constant 0 : i32
    %c0_i32_0 = arith.constant 0 : i32
    %c0_i32_1 = arith.constant 0 : i32
    %c0_i32_2 = arith.constant 0 : i32
    return %c0_i32, %c0_i32_0, %c0_i32_1 : i32, i32, i32
  }
  func.func @transform_4(%arg0: i32) -> (i32, i32) {
    %c0_i32 = arith.constant 0 : i32
    %c0_i32_0 = arith.constant 0 : i32
    %c0_i32_1 = arith.constant 0 : i32
    return %c0_i32, %c0_i32_0 : i32, i32
  }
  func.func @transform_5(%arg0: i32) -> (i32, i32) {
    %c0_i32 = arith.constant 0 : i32
    %c0_i32_0 = arith.constant 0 : i32
    %c0_i32_1 = arith.constant 0 : i32
    return %c0_i32, %c0_i32_0 : i32, i32
  }
  func.func @transform_6(%arg0: i32) -> (i32, i32, i32) {
    %c0_i32 = arith.constant 0 : i32
    %c0_i32_0 = arith.constant 0 : i32
    %c0_i32_1 = arith.constant 0 : i32
    return %arg0, %c0_i32, %c0_i32_0 : i32, i32, i32
  }
}

</mosaic_0001>

<llo_original>
// kernel: tpu_custom_call.1
$region0: #{tpu_custom_call.1}
  #allocation0 [shape = 'u32[]', space=smem, size = 0x4, offset = 0x4, fixed_abs, tag = 'smem constant byte address 0x4 - core index']
  #allocation1 [shape = 'u32[144,128]{1,0:T(1,128)}', space=vmem, size = 0x12000, scoped, tag = 'internal scratch']
  #allocation2 [shape = 'f32[18,256]{1,0:T(8,128)}', space=vmem, size = 0x6000, scoped, tag = 'scratch operand']
  %s0 = inlined_call_operand.hbm [shape: f32[9,256], index: 0, kind: input, shape index: {}]
  %s1 = inlined_call_operand.vmem [shape: f32[2,2,2,256], index: 1, kind: input, shape index: {}]
  %s2 = inlined_call_operand.vmem [shape: f32[3,2,18], index: 2, kind: input, shape index: {}]
  %s3 = inlined_call_operand.vmem [shape: f32[3,2,1], index: 3, kind: input, shape index: {}]
  %s4 = inlined_call_operand.vmem [shape: f32[8,4], index: 4, kind: input, shape index: {}]
  %s5 = inlined_call_operand.vmem [shape: f32[8,1], index: 5, kind: input, shape index: {}]
  %s6 = inlined_call_operand.hbm [shape: f32[2,8,256], index: 6, kind: output, shape index: {}]
  %s7 = sld [smem:[#allocation0]]
  $region38: #{tpu_custom_call.1} parent=0
    _
  %s9 = ssub.s32 1, %s7
  %s10 = scalar_select 0, %s9, %s7
  $region1: #{tpu_custom_call.1} parent=0
    #allocation3 [shape = 'u8[16384]{0}', space=vmem, size = 0x4000, scoped, tag = 'input window, operand 0, single buffered']
    #allocation4 [shape = 's32[1]{0}', space=sflag, size = 0x4, scoped, tag = 'scoped memory for tpu_custom_call.1']
    #allocation5 [shape = 's32[1]{0}', space=sflag, size = 0x4, scoped, tag = 'scoped memory for tpu_custom_call.1']
    #allocation6 [shape = 'u8[16384]{0}', space=vmem, size = 0x4000, scoped, tag = 'output window, operand 0, single buffered']
    %11 = vsyncpa [#allocation4], 0
    %12 = vsyncpa [#allocation5], 0
    // Predicated region
    $region2: #{tpu_custom_call.1} parent=1 // pred_check
      _
    $region3: #{tpu_custom_call.1} parent=1 // pred_check_branch
      %14 = sbr.rel (0) target = $region5
    $region4: #{tpu_custom_call.1} parent=1 // pred_region
      %s16 = ssub.s32 512, 512
      %17 = vsyncadd [#allocation4], %s16
      %s18 = sshll.u32 [#allocation3], 4
      %s19 = int_to_ptr.vmem [resolvable:$true] %s18
      %24 = dma.hbm_to_vmem [thread:$0]  %s0, 512, %s19, [#allocation4], 256, 256, 16
    $region5: #{tpu_custom_call.1} parent=1 // pred_fallthru
      _
    // Predicated region
    $region6: #{tpu_custom_call.1} parent=1 // pred_check
      _
    $region7: #{tpu_custom_call.1} parent=1 // pred_check_branch
      %26 = sbr.rel (0) target = $region9
    $region8: #{tpu_custom_call.1} parent=1 // pred_region
      _
    $region9: #{tpu_custom_call.1} parent=1 // pred_fallthru
      _
    // Predicated region
    $region10: #{tpu_custom_call.1} parent=1 // pred_check
      _
    $region11: #{tpu_custom_call.1} parent=1 // pred_check_branch
      %28 = sbr.rel (0) target = $region13
    $region12: #{tpu_custom_call.1} parent=1 // pred_region
      _
    $region13: #{tpu_custom_call.1} parent=1 // pred_fallthru
      _
    // Predicated region
    $region14: #{tpu_custom_call.1} parent=1 // pred_check
      _
    $region15: #{tpu_custom_call.1} parent=1 // pred_check_branch
      %30 = sbr.rel (0) target = $region17
    $region16: #{tpu_custom_call.1} parent=1 // pred_region
      _
    $region17: #{tpu_custom_call.1} parent=1 // pred_fallthru
      _
    // Predicated region
    $region18: #{tpu_custom_call.1} parent=1 // pred_check
      _
    $region19: #{tpu_custom_call.1} parent=1 // pred_check_branch
      %32 = sbr.rel (0) target = $region21
    $region20: #{tpu_custom_call.1} parent=1 // pred_region
      _
    $region21: #{tpu_custom_call.1} parent=1 // pred_fallthru
      _
    // Predicated region
    $region22: #{tpu_custom_call.1} parent=1 // pred_check
      _
    $region23: #{tpu_custom_call.1} parent=1 // pred_check_branch
      %34 = sbr.rel (0) target = $region25
    $region24: #{tpu_custom_call.1} parent=1 // pred_region
      _
    $region25: #{tpu_custom_call.1} parent=1 // pred_fallthru
      _
    // Predicated region
    $region26: #{tpu_custom_call.1} parent=1 // pred_check
      _
    $region27: #{tpu_custom_call.1} parent=1 // pred_check_branch
      %36 = sbr.rel (0) target = $region29
    $region28: #{tpu_custom_call.1} parent=1 // pred_region
      %37 = dma.done [#allocation4], 512
    $region29: #{tpu_custom_call.1} parent=1 // pred_fallthru
      _
    %v38 = vld [vmem:[#allocation3] ss:$8 sm:$0x3]
    %s39 = scalar_lea.vmem [#allocation3], 1
    %v40 = vld [vmem:[%s39] ss:$8 sm:$0x3]
    %s41 = scalar_lea.vmem [#allocation3], 2
    %v42 = vld [vmem:[%s41] ss:$8 sm:$0x3]
    %s43 = scalar_lea.vmem [#allocation3], 3
    %v44 = vld [vmem:[%s43] ss:$8 sm:$0x3]
    %s45 = scalar_lea.vmem [#allocation3], 5
    %v46 = vld [vmem:[%s45] ss:$8 sm:$0x3]
    %s47 = scalar_lea.vmem [#allocation3], 6
    %v48 = vld [vmem:[%s47] ss:$8 sm:$0x3]
    %s49 = scalar_lea.vmem [#allocation3], 7
    %v50 = vld [vmem:[%s49] ss:$8 sm:$0x3]
    %s51 = scalar_lea.vmem [#allocation3], 16
    %v52 = vld [vmem:[%s51] ss:$8 sm:$0x3]
    %v53 = vld [vmem:[%s2] sm:$0x3]
    %s54 = scalar_lea.vmem %s2, 2
    %v55 = vld [vmem:[%s54] sm:$0x3]
    %s56 = scalar_lea.vmem %s2, 4
    %v57 = vld [vmem:[%s56] sm:$0x3]
    %v58 = vld [vmem:[%s3] sm:$0x3]
    %s59 = scalar_lea.vmem %s3, 2
    %v60 = vld [vmem:[%s59] sm:$0x3]
    %s61 = scalar_lea.vmem %s3, 4
    %v62 = vld [vmem:[%s61] sm:$0x3]
    %v63 = vld [vmem:[%s4] sm:$0xff]
    %v64 = vld [vmem:[%s5] sm:$0xff]
    %v65 = vld [vmem:[%s1] sm:$0xf]
    %s66 = scalar_lea.vmem %s1, 4
    %v67 = vld [vmem:[%s66] sm:$0xf]
    %v70 = vunpack.c.l.s4 1983009808
    %v71 = vunpack.c.0.s8 %v70
    %v72 = vlaneseq
    %v73 = vshrl.u32 %v72, 7
    %v74 = vsub.s32 %v71, %v73
    %v75 = vrot.slane %v65, %v74
    %v76 = vcombine.high %v75, %v75
    %77 = vrot.lane.b32.xlu0 %v76, 17
    %v78 = vpop.permute.xlu0 %77
    %80 = vrot.lane.b32.xlu0 %v75, 17
    %v81 = vpop.permute.xlu0 %80
    %vm82 = vcmask 138240
    %v83 = vsel %vm82, %v81, %v78
    %v86 = vsel %vm82, %v78, %v81
    %v88 = vlaneseq
    %v89 = vshrl.u32 %v88, 7
    %v90 = vsub.s32 0, %v89
    %v91 = vrot.slane %v38, %v90
    %v92 = vlaneseq
    %v93 = vshrl.u32 %v92, 7
    %v94 = vsub.s32 1, %v93
    %v95 = vrot.slane %v38, %v94
    %v98 = vmul.f32 %v86, %v91
    %v99 = vmul.f32 %v83, %v95
    %100 = vst [vmem:[#allocation2] sm:$0x3] %v98
    %101 = vst [vmem:[#allocation2 + $0x8] sm:$0x3] %v99
    %102 = vrot.lane.b32.xlu0 %v76, 16
    %v103 = vpop.permute.xlu0 %102
    %105 = vrot.lane.b32.xlu0 %v75, 16
    %v106 = vpop.permute.xlu0 %105
    %vm107 = vcmask 130048
    %v108 = vsel %vm107, %v106, %v103
    %v111 = vsel %vm107, %v103, %v106
    %v113 = vlaneseq
    %v114 = vshrl.u32 %v113, 7
    %v115 = vsub.s32 0, %v114
    %v116 = vrot.slane %v40, %v115
    %v117 = vlaneseq
    %v118 = vshrl.u32 %v117, 7
    %v119 = vsub.s32 1, %v118
    %v120 = vrot.slane %v40, %v119
    %v123 = vmul.f32 %v111, %v116
    %v124 = vmul.f32 %v108, %v120
    %v127 = vrot.slane %v123, 6
    %v128 = vrot.slane %v124, 6
    %131 = vst [vmem:[#allocation2] sm:$0xc] %v127
    %132 = vst [vmem:[#allocation2 + $0x8] sm:$0xc] %v128
    %133 = vrot.lane.b32.xlu0 %v76, 15
    %v134 = vpop.permute.xlu0 %133
    %136 = vrot.lane.b32.xlu0 %v75, 15
    %v137 = vpop.permute.xlu0 %136
    %vm138 = vcmask 121856
    %v139 = vsel %vm138, %v137, %v134
    %v142 = vsel %vm138, %v134, %v137
    %v144 = vlaneseq
    %v145 = vshrl.u32 %v144, 7
    %v146 = vsub.s32 0, %v145
    %v147 = vrot.slane %v42, %v146
    %v148 = vlaneseq
    %v149 = vshrl.u32 %v148, 7
    %v150 = vsub.s32 1, %v149
    %v151 = vrot.slane %v42, %v150
    %v154 = vmul.f32 %v142, %v147
    %v155 = vmul.f32 %v139, %v151
    %v158 = vrot.slane %v154, 4
    %v159 = vrot.slane %v155, 4
    %162 = vst [vmem:[#allocation2] sm:$0x30] %v158
    %163 = vst [vmem:[#allocation2 + $0x8] sm:$0x30] %v159
    %164 = vrot.lane.b32.xlu0 %v76, 1
    %v165 = vpop.permute.xlu0 %164
    %167 = vrot.lane.b32.xlu0 %v75, 1
    %v168 = vpop.permute.xlu0 %167
    %vm169 = vcmask 7168
    %v170 = vsel %vm169, %v168, %v165
    %v173 = vsel %vm169, %v165, %v168
    %v175 = vlaneseq
    %v176 = vshrl.u32 %v175, 7
    %v177 = vsub.s32 0, %v176
    %v178 = vrot.slane %v44, %v177
    %v179 = vlaneseq
    %v180 = vshrl.u32 %v179, 7
    %v181 = vsub.s32 1, %v180
    %v182 = vrot.slane %v44, %v181
    %v185 = vmul.f32 %v173, %v178
    %v186 = vmul.f32 %v170, %v182
    %v189 = vrot.slane %v185, 2
    %v190 = vrot.slane %v186, 2
    %193 = vst [vmem:[#allocation2] sm:$0xc0] %v189
    %194 = vst [vmem:[#allocation2 + $0x8] sm:$0xc0] %v190
    %197 = vst [vmem:[#allocation2 + $0x10] sm:$0x3] %v75
    %198 = vst [vmem:[#allocation2 + $0x18] sm:$0x3] %v76
    %199 = vrot.lane.b32.xlu0 %v75, 127
    %v200 = vpop.permute.xlu0 %199
    %201 = vrot.lane.b32.xlu0 %v76, 127
    %v202 = vpop.permute.xlu0 %201
    %vm203 = vcmask 1039360
    %v204 = vsel %vm203, %v200, %v202
    %v208 = vsel %vm203, %v202, %v200
    %v210 = vlaneseq
    %v211 = vshrl.u32 %v210, 7
    %v212 = vsub.s32 0, %v211
    %v213 = vrot.slane %v46, %v212
    %v214 = vlaneseq
    %v215 = vshrl.u32 %v214, 7
    %v216 = vsub.s32 1, %v215
    %v217 = vrot.slane %v46, %v216
    %v220 = vmul.f32 %v204, %v213
    %v221 = vmul.f32 %v208, %v217
    %v224 = vrot.slane %v220, 6
    %v225 = vrot.slane %v221, 6
    %228 = vst [vmem:[#allocation2 + $0x10] sm:$0xc] %v224
    %229 = vst [vmem:[#allocation2 + $0x18] sm:$0xc] %v225
    %230 = vrot.lane.b32.xlu0 %v75, 113
    %v231 = vpop.permute.xlu0 %230
    %232 = vrot.lane.b32.xlu0 %v76, 113
    %v233 = vpop.permute.xlu0 %232
    %vm234 = vcmask 924672
    %v235 = vsel %vm234, %v231, %v233
    %v239 = vsel %vm234, %v233, %v231
    %v241 = vlaneseq
    %v242 = vshrl.u32 %v241, 7
    %v243 = vsub.s32 0, %v242
    %v244 = vrot.slane %v48, %v243
    %v245 = vlaneseq
    %v246 = vshrl.u32 %v245, 7
    %v247 = vsub.s32 1, %v246
    %v248 = vrot.slane %v48, %v247
    %v251 = vmul.f32 %v235, %v244
    %v252 = vmul.f32 %v239, %v248
    %v255 = vrot.slane %v251, 4
    %v256 = vrot.slane %v252, 4
    %259 = vst [vmem:[#allocation2 + $0x10] sm:$0x30] %v255
    %260 = vst [vmem:[#allocation2 + $0x18] sm:$0x30] %v256
    %261 = vrot.lane.b32.xlu0 %v75, 112
    %v262 = vpop.permute.xlu0 %261
    %263 = vrot.lane.b32.xlu0 %v76, 112
    %v264 = vpop.permute.xlu0 %263
    %vm265 = vcmask 916480
    %v266 = vsel %vm265, %v262, %v264
    %v270 = vsel %vm265, %v264, %v262
    %v272 = vlaneseq
    %v273 = vshrl.u32 %v272, 7
    %v274 = vsub.s32 0, %v273
    %v275 = vrot.slane %v50, %v274
    %v276 = vlaneseq
    %v277 = vshrl.u32 %v276, 7
    %v278 = vsub.s32 1, %v277
    %v279 = vrot.slane %v50, %v278
    %v282 = vmul.f32 %v266, %v275
    %v283 = vmul.f32 %v270, %v279
    %v286 = vrot.slane %v282, 2
    %v287 = vrot.slane %v283, 2
    %290 = vst [vmem:[#allocation2 + $0x10] sm:$0xc0] %v286
    %291 = vst [vmem:[#allocation2 + $0x18] sm:$0xc0] %v287
    %292 = vrot.lane.b32.xlu0 %v75, 111
    %v293 = vpop.permute.xlu0 %292
    %294 = vrot.lane.b32.xlu0 %v76, 111
    %v295 = vpop.permute.xlu0 %294
    %vm296 = vcmask 908288
    %v297 = vsel %vm296, %v293, %v295
    %v301 = vsel %vm296, %v295, %v293
    %v303 = vlaneseq
    %v304 = vshrl.u32 %v303, 7
    %v305 = vsub.s32 0, %v304
    %v306 = vrot.slane %v52, %v305
    %v307 = vlaneseq
    %v308 = vshrl.u32 %v307, 7
    %v309 = vsub.s32 1, %v308
    %v310 = vrot.slane %v52, %v309
    %v313 = vmul.f32 %v297, %v306
    %v314 = vmul.f32 %v301, %v310
    %315 = vst [vmem:[#allocation2 + $0x20] sm:$0x3] %v313
    %316 = vst [vmem:[#allocation2 + $0x28] sm:$0x3] %v314
    %v317 = vld [vmem:[#allocation2] sm:$0xff]
    %v318 = vld [vmem:[#allocation2 + $0x8] sm:$0xff]
    %v319 = vld [vmem:[#allocation2 + $0x10] sm:$0xff]
    %v320 = vld [vmem:[#allocation2 + $0x18] sm:$0xff]
    %v321 = vld [vmem:[#allocation2 + $0x20] sm:$0x3]
    %v322 = vld [vmem:[#allocation2 + $0x28] sm:$0x3]
    %324 = vset.pattern.permute.xlu0 0
    %325 = vperm.xlu0 %324, %v58
    %v326 = vpop.permute.xlu0 %325
    %vm328 = vcmask 146432
    %v330 = vsel %vm328, %v53, 0
    %vm332 = vcmask 1041408
    %v334 = vsel %vm332, %v321, 0
    %v337 = vsel %vm332, %v322, 0
    %339 = vmatprep.subr.mxu0 0.0
    %340 = vmatpush1.msra.mxu0 0.0
    %341 = vmatprep.subr.mxu0 0.0
    %342 = vmatpush1.msra.mxu0 0.0
    %343 = vmatprep.subr.mxu0 0.0
    %344 = vmatpush1.msra.mxu0 0.0
    %345 = vmatprep.subr.mxu0 0.0
    %346 = vmatpush1.msra.mxu0 0.0
    %347 = vmatprep.subr.mxu0 0.0
    %348 = vmatpush1.msra.mxu0 0.0
    %349 = vmatprep.subr.mxu0 0.0
    %350 = vmatpush1.msra.mxu0 0.0
    %351 = vmatprep.subr.mxu0 0.0
    %352 = vmatpush1.msra.mxu0 0.0
    %353 = vmatprep.subr.mxu0 0.0
    %354 = vmatpush1.msra.mxu0 0.0
    %355 = vmatprep.subr.mxu0 0.0
    %356 = vmatpush1.msra.mxu0 0.0
    %357 = vmatprep.subr.mxu0 0.0
    %358 = vmatpush1.msra.mxu0 0.0
    %359 = vmatprep.subr.mxu0 0.0
    %360 = vmatpush1.msra.mxu0 0.0
    %361 = vmatprep.subr.mxu0 0.0
    %362 = vmatpush1.msra.mxu0 0.0
    %363 = vmatprep.subr.mxu0 0.0
    %364 = vmatpush1.msra.mxu0 0.0
    %365 = vmatprep.subr.mxu0 %v337
    %366 = vmatpush1.msra.mxu0 %v334
    %367 = vmatprep.subr.mxu0 %v320
    %368 = vmatpush1.msra.mxu0 %v319
    %369 = vmatprep.subr.mxu0 %v318
    %370 = vmatpush1.msra.mxu0 %v317
    %371 = vmatprep.subr.mxu0 0.0
    %372 = vmatpush2.msra.mxu0 0.0
    %373 = vmatprep.subr.mxu0 0.0
    %374 = vmatpush2.msra.mxu0 0.0
    %375 = vmatprep.subr.mxu0 0.0
    %376 = vmatpush2.msra.mxu0 0.0
    %377 = vmatprep.subr.mxu0 0.0
    %378 = vmatpush2.msra.mxu0 0.0
    %379 = vmatprep.subr.mxu0 0.0
    %380 = vmatpush2.msra.mxu0 0.0
    %381 = vmatprep.subr.mxu0 0.0
    %382 = vmatpush2.msra.mxu0 0.0
    %383 = vmatprep.subr.mxu0 0.0
    %384 = vmatpush2.msra.mxu0 0.0
    %385 = vmatprep.subr.mxu0 0.0
    %386 = vmatpush2.msra.mxu0 0.0
    %387 = vmatprep.subr.mxu0 0.0
    %388 = vmatpush2.msra.mxu0 0.0
    %389 = vmatprep.subr.mxu0 0.0
    %390 = vmatpush2.msra.mxu0 0.0
    %391 = vmatprep.subr.mxu0 0.0
    %392 = vmatpush2.msra.mxu0 0.0
    %393 = vmatprep.subr.mxu0 0.0
    %394 = vmatpush2.msra.mxu0 0.0
    %395 = vmatprep.subr.mxu0 0.0
    %396 = vmatpush2.msra.mxu0 0.0
    %397 = vmatprep.subr.mxu0 0.0
    %398 = vmatpush2.msra.mxu0 0.0
    %399 = vmatprep.subr.mxu0 0.0
    %400 = vmatpush2.msra.mxu0 0.0
    %401 = vmatprep.subr.mxu0 0.0
    %402 = vmatpush2.msra.mxu0 0.0
    %403 = vmatprep.mubr.f32.mxu0 0.0
    %404 = vmatmul.mubr.f32.gmra.mxu0 %v330
    %v405 = vpop.f32.mrf.mxu0
    %v406 = vadd.f32 %v326, %v405
    %v407 = vpop.f32.mrf.mxu0
    %v408 = vadd.f32 %v326, %v407
    %409 = vdwg.mxu0
    %411 = vrot.lane.b32.xlu0 %v408, 17
    %v412 = vpop.permute.xlu0 %411
    %415 = vrot.lane.b32.xlu0 %v406, 17
    %v416 = vpop.permute.xlu0 %415
    %v417 = vsel %vm82, %v416, %v412
    %v420 = vsel %vm82, %v412, %v416
    %v421 = vmul.f32 %v420, %v91
    %v422 = vmul.f32 %v417, %v95
    %423 = vst [vmem:[#allocation2] sm:$0x3] %v421
    %424 = vst [vmem:[#allocation2 + $0x8] sm:$0x3] %v422
    %425 = vrot.lane.b32.xlu0 %v408, 16
    %v426 = vpop.permute.xlu0 %425
    %428 = vrot.lane.b32.xlu0 %v406, 16
    %v429 = vpop.permute.xlu0 %428
    %v430 = vsel %vm107, %v429, %v426
    %v433 = vsel %vm107, %v426, %v429
    %v434 = vmul.f32 %v433, %v116
    %v435 = vmul.f32 %v430, %v120
    %v438 = vrot.slane %v434, 6
    %v439 = vrot.slane %v435, 6
    %442 = vst [vmem:[#allocation2] sm:$0xc] %v438
    %443 = vst [vmem:[#allocation2 + $0x8] sm:$0xc] %v439
    %444 = vrot.lane.b32.xlu0 %v408, 15
    %v445 = vpop.permute.xlu0 %444
    %447 = vrot.lane.b32.xlu0 %v406, 15
    %v448 = vpop.permute.xlu0 %447
    %v449 = vsel %vm138, %v448, %v445
    %v452 = vsel %vm138, %v445, %v448
    %v453 = vmul.f32 %v452, %v147
    %v454 = vmul.f32 %v449, %v151
    %v457 = vrot.slane %v453, 4
    %v458 = vrot.slane %v454, 4
    %461 = vst [vmem:[#allocation2] sm:$0x30] %v457
    %462 = vst [vmem:[#allocation2 + $0x8] sm:$0x30] %v458
    %463 = vrot.lane.b32.xlu0 %v408, 1
    %v464 = vpop.permute.xlu0 %463
    %466 = vrot.lane.b32.xlu0 %v406, 1
    %v467 = vpop.permute.xlu0 %466
    %v468 = vsel %vm169, %v467, %v464
    %v471 = vsel %vm169, %v464, %v467
    %v472 = vmul.f32 %v471, %v178
    %v473 = vmul.f32 %v468, %v182
    %v476 = vrot.slane %v472, 2
    %v477 = vrot.slane %v473, 2
    %480 = vst [vmem:[#allocation2] sm:$0xc0] %v476
    %481 = vst [vmem:[#allocation2 + $0x8] sm:$0xc0] %v477
    %482 = vst [vmem:[#allocation2 + $0x10] sm:$0x3] %v406
    %483 = vst [vmem:[#allocation2 + $0x18] sm:$0x3] %v408
    %484 = vrot.lane.b32.xlu0 %v406, 127
    %v485 = vpop.permute.xlu0 %484
    %486 = vrot.lane.b32.xlu0 %v408, 127
    %v487 = vpop.permute.xlu0 %486
    %v488 = vsel %vm203, %v485, %v487
    %v492 = vsel %vm203, %v487, %v485
    %v493 = vmul.f32 %v488, %v213
    %v494 = vmul.f32 %v492, %v217
    %v497 = vrot.slane %v493, 6
    %v498 = vrot.slane %v494, 6
    %501 = vst [vmem:[#allocation2 + $0x10] sm:$0xc] %v497
    %502 = vst [vmem:[#allocation2 + $0x18] sm:$0xc] %v498
    %503 = vrot.lane.b32.xlu0 %v406, 113
    %v504 = vpop.permute.xlu0 %503
    %505 = vrot.lane.b32.xlu0 %v408, 113
    %v506 = vpop.permute.xlu0 %505
    %v507 = vsel %vm234, %v504, %v506
    %v511 = vsel %vm234, %v506, %v504
    %v512 = vmul.f32 %v507, %v244
    %v513 = vmul.f32 %v511, %v248
    %v516 = vrot.slane %v512, 4
    %v517 = vrot.slane %v513, 4
    %520 = vst [vmem:[#allocation2 + $0x10] sm:$0x30] %v516
    %521 = vst [vmem:[#allocation2 + $0x18] sm:$0x30] %v517
    %522 = vrot.lane.b32.xlu0 %v406, 112
    %v523 = vpop.permute.xlu0 %522
    %524 = vrot.lane.b32.xlu0 %v408, 112
    %v525 = vpop.permute.xlu0 %524
    %v526 = vsel %vm265, %v523, %v525
    %v530 = vsel %vm265, %v525, %v523
    %v531 = vmul.f32 %v526, %v275
    %v532 = vmul.f32 %v530, %v279
    %v535 = vrot.slane %v531, 2
    %v536 = vrot.slane %v532, 2
    %539 = vst [vmem:[#allocation2 + $0x10] sm:$0xc0] %v535
    %540 = vst [vmem:[#allocation2 + $0x18] sm:$0xc0] %v536
    %541 = vrot.lane.b32.xlu0 %v406, 111
    %v542 = vpop.permute.xlu0 %541
    %543 = vrot.lane.b32.xlu0 %v408, 111
    %v544 = vpop.permute.xlu0 %543
    %v545 = vsel %vm296, %v542, %v544
    %v549 = vsel %vm296, %v544, %v542
    %v550 = vmul.f32 %v545, %v306
    %v551 = vmul.f32 %v549, %v310
    %552 = vst [vmem:[#allocation2 + $0x20] sm:$0x3] %v550
    %553 = vst [vmem:[#allocation2 + $0x28] sm:$0x3] %v551
    %v554 = vld [vmem:[#allocation2] sm:$0xff]
    %v555 = vld [vmem:[#allocation2 + $0x8] sm:$0xff]
    %v556 = vld [vmem:[#allocation2 + $0x10] sm:$0xff]
    %v557 = vld [vmem:[#allocation2 + $0x18] sm:$0xff]
    %v558 = vld [vmem:[#allocation2 + $0x20] sm:$0x3]
    %v559 = vld [vmem:[#allocation2 + $0x28] sm:$0x3]
    %561 = vset.pattern.permute.xlu0 0
    %562 = vperm.xlu0 %561, %v60
    %v563 = vpop.permute.xlu0 %562
    %v566 = vsel %vm328, %v55, 0
    %v569 = vsel %vm332, %v558, 0
    %v572 = vsel %vm332, %v559, 0
    %574 = vmatprep.subr.mxu0 0.0
    %575 = vmatpush1.msra.mxu0 0.0
    %576 = vmatprep.subr.mxu0 0.0
    %577 = vmatpush1.msra.mxu0 0.0
    %578 = vmatprep.subr.mxu0 0.0
    %579 = vmatpush1.msra.mxu0 0.0
    %580 = vmatprep.subr.mxu0 0.0
    %581 = vmatpush1.msra.mxu0 0.0
    %582 = vmatprep.subr.mxu0 0.0
    %583 = vmatpush1.msra.mxu0 0.0
    %584 = vmatprep.subr.mxu0 0.0
    %585 = vmatpush1.msra.mxu0 0.0
    %586 = vmatprep.subr.mxu0 0.0
    %587 = vmatpush1.msra.mxu0 0.0
    %588 = vmatprep.subr.mxu0 0.0
    %589 = vmatpush1.msra.mxu0 0.0
    %590 = vmatprep.subr.mxu0 0.0
    %591 = vmatpush1.msra.mxu0 0.0
    %592 = vmatprep.subr.mxu0 0.0
    %593 = vmatpush1.msra.mxu0 0.0
    %594 = vmatprep.subr.mxu0 0.0
    %595 = vmatpush1.msra.mxu0 0.0
    %596 = vmatprep.subr.mxu0 0.0
    %597 = vmatpush1.msra.mxu0 0.0
    %598 = vmatprep.subr.mxu0 0.0
    %599 = vmatpush1.msra.mxu0 0.0
    %600 = vmatprep.subr.mxu0 %v572
    %601 = vmatpush1.msra.mxu0 %v569
    %602 = vmatprep.subr.mxu0 %v557
    %603 = vmatpush1.msra.mxu0 %v556
    %604 = vmatprep.subr.mxu0 %v555
    %605 = vmatpush1.msra.mxu0 %v554
    %606 = vmatprep.subr.mxu0 0.0
    %607 = vmatpush2.msra.mxu0 0.0
    %608 = vmatprep.subr.mxu0 0.0
    %609 = vmatpush2.msra.mxu0 0.0
    %610 = vmatprep.subr.mxu0 0.0
    %611 = vmatpush2.msra.mxu0 0.0
    %612 = vmatprep.subr.mxu0 0.0
    %613 = vmatpush2.msra.mxu0 0.0
    %614 = vmatprep.subr.mxu0 0.0
    %615 = vmatpush2.msra.mxu0 0.0
    %616 = vmatprep.subr.mxu0 0.0
    %617 = vmatpush2.msra.mxu0 0.0
    %618 = vmatprep.subr.mxu0 0.0
    %619 = vmatpush2.msra.mxu0 0.0
    %620 = vmatprep.subr.mxu0 0.0
    %621 = vmatpush2.msra.mxu0 0.0
    %622 = vmatprep.subr.mxu0 0.0
    %623 = vmatpush2.msra.mxu0 0.0
    %624 = vmatprep.subr.mxu0 0.0
    %625 = vmatpush2.msra.mxu0 0.0
    %626 = vmatprep.subr.mxu0 0.0
    %627 = vmatpush2.msra.mxu0 0.0
    %628 = vmatprep.subr.mxu0 0.0
    %629 = vmatpush2.msra.mxu0 0.0
    %630 = vmatprep.subr.mxu0 0.0
    %631 = vmatpush2.msra.mxu0 0.0
    %632 = vmatprep.subr.mxu0 0.0
    %633 = vmatpush2.msra.mxu0 0.0
    %634 = vmatprep.subr.mxu0 0.0
    %635 = vmatpush2.msra.mxu0 0.0
    %636 = vmatprep.subr.mxu0 0.0
    %637 = vmatpush2.msra.mxu0 0.0
    %638 = vmatprep.mubr.f32.mxu0 0.0
    %639 = vmatmul.mubr.f32.gmra.mxu0 %v566
    %v640 = vpop.f32.mrf.mxu0
    %v641 = vadd.f32 %v563, %v640
    %v642 = vpop.f32.mrf.mxu0
    %v643 = vadd.f32 %v563, %v642
    %644 = vdwg.mxu0
    %646 = vrot.lane.b32.xlu0 %v643, 17
    %v647 = vpop.permute.xlu0 %646
    %650 = vrot.lane.b32.xlu0 %v641, 17
    %v651 = vpop.permute.xlu0 %650
    %v652 = vsel %vm82, %v651, %v647
    %v655 = vsel %vm82, %v647, %v651
    %v656 = vmul.f32 %v655, %v91
    %v657 = vmul.f32 %v652, %v95
    %658 = vst [vmem:[#allocation2] sm:$0x3] %v656
    %659 = vst [vmem:[#allocation2 + $0x8] sm:$0x3] %v657
    %660 = vrot.lane.b32.xlu0 %v643, 16
    %v661 = vpop.permute.xlu0 %660
    %663 = vrot.lane.b32.xlu0 %v641, 16
    %v664 = vpop.permute.xlu0 %663
    %v665 = vsel %vm107, %v664, %v661
    %v668 = vsel %vm107, %v661, %v664
    %v669 = vmul.f32 %v668, %v116
    %v670 = vmul.f32 %v665, %v120
    %v673 = vrot.slane %v669, 6
    %v674 = vrot.slane %v670, 6
    %677 = vst [vmem:[#allocation2] sm:$0xc] %v673
    %678 = vst [vmem:[#allocation2 + $0x8] sm:$0xc] %v674
    %679 = vrot.lane.b32.xlu0 %v643, 15
    %v680 = vpop.permute.xlu0 %679
    %682 = vrot.lane.b32.xlu0 %v641, 15
    %v683 = vpop.permute.xlu0 %682
    %v684 = vsel %vm138, %v683, %v680
    %v687 = vsel %vm138, %v680, %v683
    %v688 = vmul.f32 %v687, %v147
    %v689 = vmul.f32 %v684, %v151
    %v692 = vrot.slane %v688, 4
    %v693 = vrot.slane %v689, 4
    %696 = vst [vmem:[#allocation2] sm:$0x30] %v692
    %697 = vst [vmem:[#allocation2 + $0x8] sm:$0x30] %v693
    %698 = vrot.lane.b32.xlu0 %v643, 1
    %v699 = vpop.permute.xlu0 %698
    %701 = vrot.lane.b32.xlu0 %v641, 1
    %v702 = vpop.permute.xlu0 %701
    %v703 = vsel %vm169, %v702, %v699
    %v706 = vsel %vm169, %v699, %v702
    %v707 = vmul.f32 %v706, %v178
    %v708 = vmul.f32 %v703, %v182
    %v711 = vrot.slane %v707, 2
    %v712 = vrot.slane %v708, 2
    %715 = vst [vmem:[#allocation2] sm:$0xc0] %v711
    %716 = vst [vmem:[#allocation2 + $0x8] sm:$0xc0] %v712
    %717 = vst [vmem:[#allocation2 + $0x10] sm:$0x3] %v641
    %718 = vst [vmem:[#allocation2 + $0x18] sm:$0x3] %v643
    %719 = vrot.lane.b32.xlu0 %v641, 127
    %v720 = vpop.permute.xlu0 %719
    %721 = vrot.lane.b32.xlu0 %v643, 127
    %v722 = vpop.permute.xlu0 %721
    %v723 = vsel %vm203, %v720, %v722
    %v727 = vsel %vm203, %v722, %v720
    %v728 = vmul.f32 %v723, %v213
    %v729 = vmul.f32 %v727, %v217
    %v732 = vrot.slane %v728, 6
    %v733 = vrot.slane %v729, 6
    %736 = vst [vmem:[#allocation2 + $0x10] sm:$0xc] %v732
    %737 = vst [vmem:[#allocation2 + $0x18] sm:$0xc] %v733
    %738 = vrot.lane.b32.xlu0 %v641, 113
    %v739 = vpop.permute.xlu0 %738
    %740 = vrot.lane.b32.xlu0 %v643, 113
    %v741 = vpop.permute.xlu0 %740
    %v742 = vsel %vm234, %v739, %v741
    %v746 = vsel %vm234, %v741, %v739
    %v747 = vmul.f32 %v742, %v244
    %v748 = vmul.f32 %v746, %v248
    %v751 = vrot.slane %v747, 4
    %v752 = vrot.slane %v748, 4
    %755 = vst [vmem:[#allocation2 + $0x10] sm:$0x30] %v751
    %756 = vst [vmem:[#allocation2 + $0x18] sm:$0x30] %v752
    %757 = vrot.lane.b32.xlu0 %v641, 112
    %v758 = vpop.permute.xlu0 %757
    %759 = vrot.lane.b32.xlu0 %v643, 112
    %v760 = vpop.permute.xlu0 %759
    %v761 = vsel %vm265, %v758, %v760
    %v765 = vsel %vm265, %v760, %v758
    %v766 = vmul.f32 %v761, %v275
    %v767 = vmul.f32 %v765, %v279
    %v770 = vrot.slane %v766, 2
    %v771 = vrot.slane %v767, 2
    %774 = vst [vmem:[#allocation2 + $0x10] sm:$0xc0] %v770
    %775 = vst [vmem:[#allocation2 + $0x18] sm:$0xc0] %v771
    %776 = vrot.lane.b32.xlu0 %v641, 111
    %v777 = vpop.permute.xlu0 %776
    %778 = vrot.lane.b32.xlu0 %v643, 111
    %v779 = vpop.permute.xlu0 %778
    %v780 = vsel %vm296, %v777, %v779
    %v784 = vsel %vm296, %v779, %v777
    %v785 = vmul.f32 %v780, %v306
    %v786 = vmul.f32 %v784, %v310
    %787 = vst [vmem:[#allocation2 + $0x20] sm:$0x3] %v785
    %788 = vst [vmem:[#allocation2 + $0x28] sm:$0x3] %v786
    %v789 = vld [vmem:[#allocation2] sm:$0xff]
    %v790 = vld [vmem:[#allocation2 + $0x8] sm:$0xff]
    %v791 = vld [vmem:[#allocation2 + $0x10] sm:$0xff]
    %v792 = vld [vmem:[#allocation2 + $0x18] sm:$0xff]
    %v793 = vld [vmem:[#allocation2 + $0x20] sm:$0x3]
    %v794 = vld [vmem:[#allocation2 + $0x28] sm:$0x3]
    %796 = vset.pattern.permute.xlu0 0
    %797 = vperm.xlu0 %796, %v62
    %v798 = vpop.permute.xlu0 %797
    %v801 = vsel %vm328, %v57, 0
    %v804 = vsel %vm332, %v793, 0
    %v807 = vsel %vm332, %v794, 0
    %809 = vmatprep.subr.mxu0 0.0
    %810 = vmatpush1.msra.mxu0 0.0
    %811 = vmatprep.subr.mxu0 0.0
    %812 = vmatpush1.msra.mxu0 0.0
    %813 = vmatprep.subr.mxu0 0.0
    %814 = vmatpush1.msra.mxu0 0.0
    %815 = vmatprep.subr.mxu0 0.0
    %816 = vmatpush1.msra.mxu0 0.0
    %817 = vmatprep.subr.mxu0 0.0
    %818 = vmatpush1.msra.mxu0 0.0
    %819 = vmatprep.subr.mxu0 0.0
    %820 = vmatpush1.msra.mxu0 0.0
    %821 = vmatprep.subr.mxu0 0.0
    %822 = vmatpush1.msra.mxu0 0.0
    %823 = vmatprep.subr.mxu0 0.0
    %824 = vmatpush1.msra.mxu0 0.0
    %825 = vmatprep.subr.mxu0 0.0
    %826 = vmatpush1.msra.mxu0 0.0
    %827 = vmatprep.subr.mxu0 0.0
    %828 = vmatpush1.msra.mxu0 0.0
    %829 = vmatprep.subr.mxu0 0.0
    %830 = vmatpush1.msra.mxu0 0.0
    %831 = vmatprep.subr.mxu0 0.0
    %832 = vmatpush1.msra.mxu0 0.0
    %833 = vmatprep.subr.mxu0 0.0
    %834 = vmatpush1.msra.mxu0 0.0
    %835 = vmatprep.subr.mxu0 %v807
    %836 = vmatpush1.msra.mxu0 %v804
    %837 = vmatprep.subr.mxu0 %v792
    %838 = vmatpush1.msra.mxu0 %v791
    %839 = vmatprep.subr.mxu0 %v790
    %840 = vmatpush1.msra.mxu0 %v789
    %841 = vmatprep.subr.mxu0 0.0
    %842 = vmatpush2.msra.mxu0 0.0
    %843 = vmatprep.subr.mxu0 0.0
    %844 = vmatpush2.msra.mxu0 0.0
    %845 = vmatprep.subr.mxu0 0.0
    %846 = vmatpush2.msra.mxu0 0.0
    %847 = vmatprep.subr.mxu0 0.0
    %848 = vmatpush2.msra.mxu0 0.0
    %849 = vmatprep.subr.mxu0 0.0
    %850 = vmatpush2.msra.mxu0 0.0
    %851 = vmatprep.subr.mxu0 0.0
    %852 = vmatpush2.msra.mxu0 0.0
    %853 = vmatprep.subr.mxu0 0.0
    %854 = vmatpush2.msra.mxu0 0.0
    %855 = vmatprep.subr.mxu0 0.0
    %856 = vmatpush2.msra.mxu0 0.0
    %857 = vmatprep.subr.mxu0 0.0
    %858 = vmatpush2.msra.mxu0 0.0
    %859 = vmatprep.subr.mxu0 0.0
    %860 = vmatpush2.msra.mxu0 0.0
    %861 = vmatprep.subr.mxu0 0.0
    %862 = vmatpush2.msra.mxu0 0.0
    %863 = vmatprep.subr.mxu0 0.0
    %864 = vmatpush2.msra.mxu0 0.0
    %865 = vmatprep.subr.mxu0 0.0
    %866 = vmatpush2.msra.mxu0 0.0
    %867 = vmatprep.subr.mxu0 0.0
    %868 = vmatpush2.msra.mxu0 0.0
    %869 = vmatprep.subr.mxu0 0.0
    %870 = vmatpush2.msra.mxu0 0.0
    %871 = vmatprep.subr.mxu0 0.0
    %872 = vmatpush2.msra.mxu0 0.0
    %873 = vmatprep.mubr.f32.mxu0 0.0
    %874 = vmatmul.mubr.f32.gmra.mxu0 %v801
    %v875 = vpop.f32.mrf.mxu0
    %v876 = vadd.f32 %v798, %v875
    %v877 = vpop.f32.mrf.mxu0
    %v878 = vadd.f32 %v798, %v877
    %879 = vdwg.mxu0
    %881 = vrot.lane.b32.xlu0 %v63, 126
    %v882 = vpop.permute.xlu0 %881
    %v885 = vunpack.c.l.s4 1983009808
    %v886 = vunpack.c.0.s8 %v885
    %v887 = vlaneseq
    %v888 = vshrl.u32 %v887, 7
    %v889 = vsub.s32 %v886, %v888
    %v890 = vrot.slane %v67, %v889
    %v891 = vcombine.high %v890, %v890
    %vm892 = vcmask 15360
    %v893 = vsel %vm892, %v882, 0
    %v895 = vsel %vm332, %v890, 0
    %v897 = vsel %vm332, %v891, 0
    %899 = vmatprep.subr.mxu0 0.0
    %900 = vmatpush1.msra.mxu0 0.0
    %901 = vmatprep.subr.mxu0 0.0
    %902 = vmatpush1.msra.mxu0 0.0
    %903 = vmatprep.subr.mxu0 0.0
    %904 = vmatpush1.msra.mxu0 0.0
    %905 = vmatprep.subr.mxu0 0.0
    %906 = vmatpush1.msra.mxu0 0.0
    %907 = vmatprep.subr.mxu0 0.0
    %908 = vmatpush1.msra.mxu0 0.0
    %909 = vmatprep.subr.mxu0 0.0
    %910 = vmatpush1.msra.mxu0 0.0
    %911 = vmatprep.subr.mxu0 0.0
    %912 = vmatpush1.msra.mxu0 0.0
    %913 = vmatprep.subr.mxu0 0.0
    %914 = vmatpush1.msra.mxu0 0.0
    %915 = vmatprep.subr.mxu0 0.0
    %916 = vmatpush1.msra.mxu0 0.0
    %917 = vmatprep.subr.mxu0 0.0
    %918 = vmatpush1.msra.mxu0 0.0
    %919 = vmatprep.subr.mxu0 0.0
    %920 = vmatpush1.msra.mxu0 0.0
    %921 = vmatprep.subr.mxu0 0.0
    %922 = vmatpush1.msra.mxu0 0.0
    %923 = vmatprep.subr.mxu0 0.0
    %924 = vmatpush1.msra.mxu0 0.0
    %925 = vmatprep.subr.mxu0 0.0
    %926 = vmatpush1.msra.mxu0 0.0
    %927 = vmatprep.subr.mxu0 0.0
    %928 = vmatpush1.msra.mxu0 0.0
    %929 = vmatprep.subr.mxu0 %v897
    %930 = vmatpush1.msra.mxu0 %v895
    %931 = vmatprep.subr.mxu0 0.0
    %932 = vmatpush2.msra.mxu0 0.0
    %933 = vmatprep.subr.mxu0 0.0
    %934 = vmatpush2.msra.mxu0 0.0
    %935 = vmatprep.subr.mxu0 0.0
    %936 = vmatpush2.msra.mxu0 0.0
    %937 = vmatprep.subr.mxu0 0.0
    %938 = vmatpush2.msra.mxu0 0.0
    %939 = vmatprep.subr.mxu0 0.0
    %940 = vmatpush2.msra.mxu0 0.0
    %941 = vmatprep.subr.mxu0 0.0
    %942 = vmatpush2.msra.mxu0 0.0
    %943 = vmatprep.subr.mxu0 0.0
    %944 = vmatpush2.msra.mxu0 0.0
    %945 = vmatprep.subr.mxu0 0.0
    %946 = vmatpush2.msra.mxu0 0.0
    %947 = vmatprep.subr.mxu0 0.0
    %948 = vmatpush2.msra.mxu0 0.0
    %949 = vmatprep.subr.mxu0 0.0
    %950 = vmatpush2.msra.mxu0 0.0
    %951 = vmatprep.subr.mxu0 0.0
    %952 = vmatpush2.msra.mxu0 0.0
    %953 = vmatprep.subr.mxu0 0.0
    %954 = vmatpush2.msra.mxu0 0.0
    %955 = vmatprep.subr.mxu0 0.0
    %956 = vmatpush2.msra.mxu0 0.0
    %957 = vmatprep.subr.mxu0 0.0
    %958 = vmatpush2.msra.mxu0 0.0
    %959 = vmatprep.subr.mxu0 0.0
    %960 = vmatpush2.msra.mxu0 0.0
    %961 = vmatprep.subr.mxu0 0.0
    %962 = vmatpush2.msra.mxu0 0.0
    %963 = vmatprep.mubr.f32.mxu0 0.0
    %964 = vmatmul.mubr.f32.gmra.mxu0 %v893
    %v965 = vpop.f32.mrf.mxu0
    %v966 = vadd.f32 0.0, %v965
    %v967 = vpop.f32.mrf.mxu0
    %v968 = vadd.f32 0.0, %v967
    %969 = vdwg.mxu0
    %v970 = vsel %vm892, %v63, 0
    %v973 = vsel %vm332, %v876, 0
    %v976 = vsel %vm332, %v878, 0
    %978 = vmatprep.subr.mxu0 0.0
    %979 = vmatpush1.msra.mxu0 0.0
    %980 = vmatprep.subr.mxu0 0.0
    %981 = vmatpush1.msra.mxu0 0.0
    %982 = vmatprep.subr.mxu0 0.0
    %983 = vmatpush1.msra.mxu0 0.0
    %984 = vmatprep.subr.mxu0 0.0
    %985 = vmatpush1.msra.mxu0 0.0
    %986 = vmatprep.subr.mxu0 0.0
    %987 = vmatpush1.msra.mxu0 0.0
    %988 = vmatprep.subr.mxu0 0.0
    %989 = vmatpush1.msra.mxu0 0.0
    %990 = vmatprep.subr.mxu0 0.0
    %991 = vmatpush1.msra.mxu0 0.0
    %992 = vmatprep.subr.mxu0 0.0
    %993 = vmatpush1.msra.mxu0 0.0
    %994 = vmatprep.subr.mxu0 0.0
    %995 = vmatpush1.msra.mxu0 0.0
    %996 = vmatprep.subr.mxu0 0.0
    %997 = vmatpush1.msra.mxu0 0.0
    %998 = vmatprep.subr.mxu0 0.0
    %999 = vmatpush1.msra.mxu0 0.0
    %1000 = vmatprep.subr.mxu0 0.0
    %1001 = vmatpush1.msra.mxu0 0.0
    %1002 = vmatprep.subr.mxu0 0.0
    %1003 = vmatpush1.msra.mxu0 0.0
    %1004 = vmatprep.subr.mxu0 0.0
    %1005 = vmatpush1.msra.mxu0 0.0
    %1006 = vmatprep.subr.mxu0 0.0
    %1007 = vmatpush1.msra.mxu0 0.0
    %1008 = vmatprep.subr.mxu0 %v976
    %1009 = vmatpush1.msra.mxu0 %v973
    %1010 = vmatprep.subr.mxu0 0.0
    %1011 = vmatpush2.msra.mxu0 0.0
    %1012 = vmatprep.subr.mxu0 0.0
    %1013 = vmatpush2.msra.mxu0 0.0
    %1014 = vmatprep.subr.mxu0 0.0
    %1015 = vmatpush2.msra.mxu0 0.0
    %1016 = vmatprep.subr.mxu0 0.0
    %1017 = vmatpush2.msra.mxu0 0.0
    %1018 = vmatprep.subr.mxu0 0.0
    %1019 = vmatpush2.msra.mxu0 0.0
    %1020 = vmatprep.subr.mxu0 0.0
    %1021 = vmatpush2.msra.mxu0 0.0
    %1022 = vmatprep.subr.mxu0 0.0
    %1023 = vmatpush2.msra.mxu0 0.0
    %1024 = vmatprep.subr.mxu0 0.0
    %1025 = vmatpush2.msra.mxu0 0.0
    %1026 = vmatprep.subr.mxu0 0.0
    %1027 = vmatpush2.msra.mxu0 0.0
    %1028 = vmatprep.subr.mxu0 0.0
    %1029 = vmatpush2.msra.mxu0 0.0
    %1030 = vmatprep.subr.mxu0 0.0
    %1031 = vmatpush2.msra.mxu0 0.0
    %1032 = vmatprep.subr.mxu0 0.0
    %1033 = vmatpush2.msra.mxu0 0.0
    %1034 = vmatprep.subr.mxu0 0.0
    %1035 = vmatpush2.msra.mxu0 0.0
    %1036 = vmatprep.subr.mxu0 0.0
    %1037 = vmatpush2.msra.mxu0 0.0
    %1038 = vmatprep.subr.mxu0 0.0
    %1039 = vmatpush2.msra.mxu0 0.0
    %1040 = vmatprep.subr.mxu0 0.0
    %1041 = vmatpush2.msra.mxu0 0.0
    %1042 = vmatprep.mubr.f32.mxu0 0.0
    %1043 = vmatmul.mubr.f32.gmra.mxu0 %v970
    %v1044 = vpop.f32.mrf.mxu0
    %v1045 = vadd.f32 %v966, %v1044
    %v1046 = vpop.f32.mrf.mxu0
    %v1047 = vadd.f32 %v968, %v1046
    %1048 = vdwg.mxu0
    %1050 = vset.pattern.permute.xlu0 0
    %1051 = vperm.xlu0 %1050, %v64
    %v1052 = vpop.permute.xlu0 %1051
    %v1054 = vadd.f32 %v1045, %v1052
    %v1055 = vadd.f32 %v1047, %v1052
    %1056 = vst [vmem:[#allocation6] sm:$0xff] %v1054
    %1057 = vst [vmem:[#allocation6 + $0x8] sm:$0xff] %v1055
    %s1058 = scalar_lea.vmem %s1, 8
    %v1059 = vld [vmem:[%s1058] sm:$0xf]
    %s1060 = scalar_lea.vmem %s1, 12
    %v1061 = vld [vmem:[%s1060] sm:$0xf]
    %v1064 = vunpack.c.l.s4 1983009808
    %v1065 = vunpack.c.0.s8 %v1064
    %v1066 = vlaneseq
    %v1067 = vshrl.u32 %v1066, 7
    %v1068 = vsub.s32 %v1065, %v1067
    %v1069 = vrot.slane %v1059, %v1068
    %v1070 = vcombine.high %v1069, %v1069
    %1071 = vrot.lane.b32.xlu0 %v1070, 17
    %v1072 = vpop.permute.xlu0 %1071
    %1074 = vrot.lane.b32.xlu0 %v1069, 17
    %v1075 = vpop.permute.xlu0 %1074
    %v1076 = vsel %vm82, %v1075, %v1072
    %v1079 = vsel %vm82, %v1072, %v1075
    %v1080 = vmul.f32 %v1079, %v91
    %v1081 = vmul.f32 %v1076, %v95
    %1082 = vst [vmem:[#allocation2] sm:$0x3] %v1080
    %1083 = vst [vmem:[#allocation2 + $0x8] sm:$0x3] %v1081
    %1084 = vrot.lane.b32.xlu0 %v1070, 16
    %v1085 = vpop.permute.xlu0 %1084
    %1087 = vrot.lane.b32.xlu0 %v1069, 16
    %v1088 = vpop.permute.xlu0 %1087
    %v1089 = vsel %vm107, %v1088, %v1085
    %v1092 = vsel %vm107, %v1085, %v1088
    %v1093 = vmul.f32 %v1092, %v116
    %v1094 = vmul.f32 %v1089, %v120
    %v1097 = vrot.slane %v1093, 6
    %v1098 = vrot.slane %v1094, 6
    %1101 = vst [vmem:[#allocation2] sm:$0xc] %v1097
    %1102 = vst [vmem:[#allocation2 + $0x8] sm:$0xc] %v1098
    %1103 = vrot.lane.b32.xlu0 %v1070, 15
    %v1104 = vpop.permute.xlu0 %1103
    %1106 = vrot.lane.b32.xlu0 %v1069, 15
    %v1107 = vpop.permute.xlu0 %1106
    %v1108 = vsel %vm138, %v1107, %v1104
    %v1111 = vsel %vm138, %v1104, %v1107
    %v1112 = vmul.f32 %v1111, %v147
    %v1113 = vmul.f32 %v1108, %v151
    %v1116 = vrot.slane %v1112, 4
    %v1117 = vrot.slane %v1113, 4
    %1120 = vst [vmem:[#allocation2] sm:$0x30] %v1116
    %1121 = vst [vmem:[#allocation2 + $0x8] sm:$0x30] %v1117
    %1122 = vrot.lane.b32.xlu0 %v1070, 1
    %v1123 = vpop.permute.xlu0 %1122
    %1125 = vrot.lane.b32.xlu0 %v1069, 1
    %v1126 = vpop.permute.xlu0 %1125
    %v1127 = vsel %vm169, %v1126, %v1123
    %v1130 = vsel %vm169, %v1123, %v1126
    %v1131 = vmul.f32 %v1130, %v178
    %v1132 = vmul.f32 %v1127, %v182
    %v1135 = vrot.slane %v1131, 2
    %v1136 = vrot.slane %v1132, 2
    %1139 = vst [vmem:[#allocation2] sm:$0xc0] %v1135
    %1140 = vst [vmem:[#allocation2 + $0x8] sm:$0xc0] %v1136
    %1143 = vst [vmem:[#allocation2 + $0x10] sm:$0x3] %v1069
    %1144 = vst [vmem:[#allocation2 + $0x18] sm:$0x3] %v1070
    %1145 = vrot.lane.b32.xlu0 %v1069, 127
    %v1146 = vpop.permute.xlu0 %1145
    %1147 = vrot.lane.b32.xlu0 %v1070, 127
    %v1148 = vpop.permute.xlu0 %1147
    %v1149 = vsel %vm203, %v1146, %v1148
    %v1153 = vsel %vm203, %v1148, %v1146
    %v1154 = vmul.f32 %v1149, %v213
    %v1155 = vmul.f32 %v1153, %v217
    %v1158 = vrot.slane %v1154, 6
    %v1159 = vrot.slane %v1155, 6
    %1162 = vst [vmem:[#allocation2 + $0x10] sm:$0xc] %v1158
    %1163 = vst [vmem:[#allocation2 + $0x18] sm:$0xc] %v1159
    %1164 = vrot.lane.b32.xlu0 %v1069, 113
    %v1165 = vpop.permute.xlu0 %1164
    %1166 = vrot.lane.b32.xlu0 %v1070, 113
    %v1167 = vpop.permute.xlu0 %1166
    %v1168 = vsel %vm234, %v1165, %v1167
    %v1172 = vsel %vm234, %v1167, %v1165
    %v1173 = vmul.f32 %v1168, %v244
    %v1174 = vmul.f32 %v1172, %v248
    %v1177 = vrot.slane %v1173, 4
    %v1178 = vrot.slane %v1174, 4
    %1181 = vst [vmem:[#allocation2 + $0x10] sm:$0x30] %v1177
    %1182 = vst [vmem:[#allocation2 + $0x18] sm:$0x30] %v1178
    %1183 = vrot.lane.b32.xlu0 %v1069, 112
    %v1184 = vpop.permute.xlu0 %1183
    %1185 = vrot.lane.b32.xlu0 %v1070, 112
    %v1186 = vpop.permute.xlu0 %1185
    %v1187 = vsel %vm265, %v1184, %v1186
    %v1191 = vsel %vm265, %v1186, %v1184
    %v1192 = vmul.f32 %v1187, %v275
    %v1193 = vmul.f32 %v1191, %v279
    %v1196 = vrot.slane %v1192, 2
    %v1197 = vrot.slane %v1193, 2
    %1200 = vst [vmem:[#allocation2 + $0x10] sm:$0xc0] %v1196
    %1201 = vst [vmem:[#allocation2 + $0x18] sm:$0xc0] %v1197
    %1202 = vrot.lane.b32.xlu0 %v1069, 111
    %v1203 = vpop.permute.xlu0 %1202
    %1204 = vrot.lane.b32.xlu0 %v1070, 111
    %v1205 = vpop.permute.xlu0 %1204
    %v1206 = vsel %vm296, %v1203, %v1205
    %v1210 = vsel %vm296, %v1205, %v1203
    %v1211 = vmul.f32 %v1206, %v306
    %v1212 = vmul.f32 %v1210, %v310
    %1213 = vst [vmem:[#allocation2 + $0x20] sm:$0x3] %v1211
    %1214 = vst [vmem:[#allocation2 + $0x28] sm:$0x3] %v1212
    %v1215 = vld [vmem:[#allocation2] sm:$0xff]
    %v1216 = vld [vmem:[#allocation2 + $0x8] sm:$0xff]
    %v1217 = vld [vmem:[#allocation2 + $0x10] sm:$0xff]
    %v1218 = vld [vmem:[#allocation2 + $0x18] sm:$0xff]
    %v1219 = vld [vmem:[#allocation2 + $0x20] sm:$0x3]
    %v1220 = vld [vmem:[#allocation2 + $0x28] sm:$0x3]
    %v1222 = vsel %vm332, %v1219, 0
    %v1225 = vsel %vm332, %v1220, 0
    %1227 = vmatprep.subr.mxu0 0.0
    %1228 = vmatpush1.msra.mxu0 0.0
    %1229 = vmatprep.subr.mxu0 0.0
    %1230 = vmatpush1.msra.mxu0 0.0
    %1231 = vmatprep.subr.mxu0 0.0
    %1232 = vmatpush1.msra.mxu0 0.0
    %1233 = vmatprep.subr.mxu0 0.0
    %1234 = vmatpush1.msra.mxu0 0.0
    %1235 = vmatprep.subr.mxu0 0.0
    %1236 = vmatpush1.msra.mxu0 0.0
    %1237 = vmatprep.subr.mxu0 0.0
    %1238 = vmatpush1.msra.mxu0 0.0
    %1239 = vmatprep.subr.mxu0 0.0
    %1240 = vmatpush1.msra.mxu0 0.0
    %1241 = vmatprep.subr.mxu0 0.0
    %1242 = vmatpush1.msra.mxu0 0.0
    %1243 = vmatprep.subr.mxu0 0.0
    %1244 = vmatpush1.msra.mxu0 0.0
    %1245 = vmatprep.subr.mxu0 0.0
    %1246 = vmatpush1.msra.mxu0 0.0
    %1247 = vmatprep.subr.mxu0 0.0
    %1248 = vmatpush1.msra.mxu0 0.0
    %1249 = vmatprep.subr.mxu0 0.0
    %1250 = vmatpush1.msra.mxu0 0.0
    %1251 = vmatprep.subr.mxu0 0.0
    %1252 = vmatpush1.msra.mxu0 0.0
    %1253 = vmatprep.subr.mxu0 %v1225
    %1254 = vmatpush1.msra.mxu0 %v1222
    %1255 = vmatprep.subr.mxu0 %v1218
    %1256 = vmatpush1.msra.mxu0 %v1217
    %1257 = vmatprep.subr.mxu0 %v1216
    %1258 = vmatpush1.msra.mxu0 %v1215
    %1259 = vmatprep.subr.mxu0 0.0
    %1260 = vmatpush2.msra.mxu0 0.0
    %1261 = vmatprep.subr.mxu0 0.0
    %1262 = vmatpush2.msra.mxu0 0.0
    %1263 = vmatprep.subr.mxu0 0.0
    %1264 = vmatpush2.msra.mxu0 0.0
    %1265 = vmatprep.subr.mxu0 0.0
    %1266 = vmatpush2.msra.mxu0 0.0
    %1267 = vmatprep.subr.mxu0 0.0
    %1268 = vmatpush2.msra.mxu0 0.0
    %1269 = vmatprep.subr.mxu0 0.0
    %1270 = vmatpush2.msra.mxu0 0.0
    %1271 = vmatprep.subr.mxu0 0.0
    %1272 = vmatpush2.msra.mxu0 0.0
    %1273 = vmatprep.subr.mxu0 0.0
    %1274 = vmatpush2.msra.mxu0 0.0
    %1275 = vmatprep.subr.mxu0 0.0
    %1276 = vmatpush2.msra.mxu0 0.0
    %1277 = vmatprep.subr.mxu0 0.0
    %1278 = vmatpush2.msra.mxu0 0.0
    %1279 = vmatprep.subr.mxu0 0.0
    %1280 = vmatpush2.msra.mxu0 0.0
    %1281 = vmatprep.subr.mxu0 0.0
    %1282 = vmatpush2.msra.mxu0 0.0
    %1283 = vmatprep.subr.mxu0 0.0
    %1284 = vmatpush2.msra.mxu0 0.0
    %1285 = vmatprep.subr.mxu0 0.0
    %1286 = vmatpush2.msra.mxu0 0.0
    %1287 = vmatprep.subr.mxu0 0.0
    %1288 = vmatpush2.msra.mxu0 0.0
    %1289 = vmatprep.subr.mxu0 0.0
    %1290 = vmatpush2.msra.mxu0 0.0
    %1291 = vmatprep.mubr.f32.mxu0 0.0
    %1292 = vmatmul.mubr.f32.gmra.mxu0 %v330
    %v1293 = vpop.f32.mrf.mxu0
    %v1294 = vadd.f32 %v326, %v1293
    %v1295 = vpop.f32.mrf.mxu0
    %v1296 = vadd.f32 %v326, %v1295
    %1297 = vdwg.mxu0
    %1299 = vrot.lane.b32.xlu0 %v1296, 17
    %v1300 = vpop.permute.xlu0 %1299
    %1303 = vrot.lane.b32.xlu0 %v1294, 17
    %v1304 = vpop.permute.xlu0 %1303
    %v1305 = vsel %vm82, %v1304, %v1300
    %v1308 = vsel %vm82, %v1300, %v1304
    %v1309 = vmul.f32 %v1308, %v91
    %v1310 = vmul.f32 %v1305, %v95
    %1311 = vst [vmem:[#allocation2] sm:$0x3] %v1309
    %1312 = vst [vmem:[#allocation2 + $0x8] sm:$0x3] %v1310
    %1313 = vrot.lane.b32.xlu0 %v1296, 16
    %v1314 = vpop.permute.xlu0 %1313
    %1316 = vrot.lane.b32.xlu0 %v1294, 16
    %v1317 = vpop.permute.xlu0 %1316
    %v1318 = vsel %vm107, %v1317, %v1314
    %v1321 = vsel %vm107, %v1314, %v1317
    %v1322 = vmul.f32 %v1321, %v116
    %v1323 = vmul.f32 %v1318, %v120
    %v1326 = vrot.slane %v1322, 6
    %v1327 = vrot.slane %v1323, 6
    %1330 = vst [vmem:[#allocation2] sm:$0xc] %v1326
    %1331 = vst [vmem:[#allocation2 + $0x8] sm:$0xc] %v1327
    %1332 = vrot.lane.b32.xlu0 %v1296, 15
    %v1333 = vpop.permute.xlu0 %1332
    %1335 = vrot.lane.b32.xlu0 %v1294, 15
    %v1336 = vpop.permute.xlu0 %1335
    %v1337 = vsel %vm138, %v1336, %v1333
    %v1340 = vsel %vm138, %v1333, %v1336
    %v1341 = vmul.f32 %v1340, %v147
    %v1342 = vmul.f32 %v1337, %v151
    %v1345 = vrot.slane %v1341, 4
    %v1346 = vrot.slane %v1342, 4
    %1349 = vst [vmem:[#allocation2] sm:$0x30] %v1345
    %1350 = vst [vmem:[#allocation2 + $0x8] sm:$0x30] %v1346
    %1351 = vrot.lane.b32.xlu0 %v1296, 1
    %v1352 = vpop.permute.xlu0 %1351
    %1354 = vrot.lane.b32.xlu0 %v1294, 1
    %v1355 = vpop.permute.xlu0 %1354
    %v1356 = vsel %vm169, %v1355, %v1352
    %v1359 = vsel %vm169, %v1352, %v1355
    %v1360 = vmul.f32 %v1359, %v178
    %v1361 = vmul.f32 %v1356, %v182
    %v1364 = vrot.slane %v1360, 2
    %v1365 = vrot.slane %v1361, 2
    %1368 = vst [vmem:[#allocation2] sm:$0xc0] %v1364
    %1369 = vst [vmem:[#allocation2 + $0x8] sm:$0xc0] %v1365
    %1370 = vst [vmem:[#allocation2 + $0x10] sm:$0x3] %v1294
    %1371 = vst [vmem:[#allocation2 + $0x18] sm:$0x3] %v1296
    %1372 = vrot.lane.b32.xlu0 %v1294, 127
    %v1373 = vpop.permute.xlu0 %1372
    %1374 = vrot.lane.b32.xlu0 %v1296, 127
    %v1375 = vpop.permute.xlu0 %1374
    %v1376 = vsel %vm203, %v1373, %v1375
    %v1380 = vsel %vm203, %v1375, %v1373
    %v1381 = vmul.f32 %v1376, %v213
    %v1382 = vmul.f32 %v1380, %v217
    %v1385 = vrot.slane %v1381, 6
    %v1386 = vrot.slane %v1382, 6
    %1389 = vst [vmem:[#allocation2 + $0x10] sm:$0xc] %v1385
    %1390 = vst [vmem:[#allocation2 + $0x18] sm:$0xc] %v1386
    %1391 = vrot.lane.b32.xlu0 %v1294, 113
    %v1392 = vpop.permute.xlu0 %1391
    %1393 = vrot.lane.b32.xlu0 %v1296, 113
    %v1394 = vpop.permute.xlu0 %1393
    %v1395 = vsel %vm234, %v1392, %v1394
    %v1399 = vsel %vm234, %v1394, %v1392
    %v1400 = vmul.f32 %v1395, %v244
    %v1401 = vmul.f32 %v1399, %v248
    %v1404 = vrot.slane %v1400, 4
    %v1405 = vrot.slane %v1401, 4
    %1408 = vst [vmem:[#allocation2 + $0x10] sm:$0x30] %v1404
    %1409 = vst [vmem:[#allocation2 + $0x18] sm:$0x30] %v1405
    %1410 = vrot.lane.b32.xlu0 %v1294, 112
    %v1411 = vpop.permute.xlu0 %1410
    %1412 = vrot.lane.b32.xlu0 %v1296, 112
    %v1413 = vpop.permute.xlu0 %1412
    %v1414 = vsel %vm265, %v1411, %v1413
    %v1418 = vsel %vm265, %v1413, %v1411
    %v1419 = vmul.f32 %v1414, %v275
    %v1420 = vmul.f32 %v1418, %v279
    %v1423 = vrot.slane %v1419, 2
    %v1424 = vrot.slane %v1420, 2
    %1427 = vst [vmem:[#allocation2 + $0x10] sm:$0xc0] %v1423
    %1428 = vst [vmem:[#allocation2 + $0x18] sm:$0xc0] %v1424
    %1429 = vrot.lane.b32.xlu0 %v1294, 111
    %v1430 = vpop.permute.xlu0 %1429
    %1431 = vrot.lane.b32.xlu0 %v1296, 111
    %v1432 = vpop.permute.xlu0 %1431
    %v1433 = vsel %vm296, %v1430, %v1432
    %v1437 = vsel %vm296, %v1432, %v1430
    %v1438 = vmul.f32 %v1433, %v306
    %v1439 = vmul.f32 %v1437, %v310
    %1440 = vst [vmem:[#allocation2 + $0x20] sm:$0x3] %v1438
    %1441 = vst [vmem:[#allocation2 + $0x28] sm:$0x3] %v1439
    %v1442 = vld [vmem:[#allocation2] sm:$0xff]
    %v1443 = vld [vmem:[#allocation2 + $0x8] sm:$0xff]
    %v1444 = vld [vmem:[#allocation2 + $0x10] sm:$0xff]
    %v1445 = vld [vmem:[#allocation2 + $0x18] sm:$0xff]
    %v1446 = vld [vmem:[#allocation2 + $0x20] sm:$0x3]
    %v1447 = vld [vmem:[#allocation2 + $0x28] sm:$0x3]
    %v1449 = vsel %vm332, %v1446, 0
    %v1452 = vsel %vm332, %v1447, 0
    %1454 = vmatprep.subr.mxu0 0.0
    %1455 = vmatpush1.msra.mxu0 0.0
    %1456 = vmatprep.subr.mxu0 0.0
    %1457 = vmatpush1.msra.mxu0 0.0
    %1458 = vmatprep.subr.mxu0 0.0
    %1459 = vmatpush1.msra.mxu0 0.0
    %1460 = vmatprep.subr.mxu0 0.0
    %1461 = vmatpush1.msra.mxu0 0.0
    %1462 = vmatprep.subr.mxu0 0.0
    %1463 = vmatpush1.msra.mxu0 0.0
    %1464 = vmatprep.subr.mxu0 0.0
    %1465 = vmatpush1.msra.mxu0 0.0
    %1466 = vmatprep.subr.mxu0 0.0
    %1467 = vmatpush1.msra.mxu0 0.0
    %1468 = vmatprep.subr.mxu0 0.0
    %1469 = vmatpush1.msra.mxu0 0.0
    %1470 = vmatprep.subr.mxu0 0.0
    %1471 = vmatpush1.msra.mxu0 0.0
    %1472 = vmatprep.subr.mxu0 0.0
    %1473 = vmatpush1.msra.mxu0 0.0
    %1474 = vmatprep.subr.mxu0 0.0
    %1475 = vmatpush1.msra.mxu0 0.0
    %1476 = vmatprep.subr.mxu0 0.0
    %1477 = vmatpush1.msra.mxu0 0.0
    %1478 = vmatprep.subr.mxu0 0.0
    %1479 = vmatpush1.msra.mxu0 0.0
    %1480 = vmatprep.subr.mxu0 %v1452
    %1481 = vmatpush1.msra.mxu0 %v1449
    %1482 = vmatprep.subr.mxu0 %v1445
    %1483 = vmatpush1.msra.mxu0 %v1444
    %1484 = vmatprep.subr.mxu0 %v1443
    %1485 = vmatpush1.msra.mxu0 %v1442
    %1486 = vmatprep.subr.mxu0 0.0
    %1487 = vmatpush2.msra.mxu0 0.0
    %1488 = vmatprep.subr.mxu0 0.0
    %1489 = vmatpush2.msra.mxu0 0.0
    %1490 = vmatprep.subr.mxu0 0.0
    %1491 = vmatpush2.msra.mxu0 0.0
    %1492 = vmatprep.subr.mxu0 0.0
    %1493 = vmatpush2.msra.mxu0 0.0
    %1494 = vmatprep.subr.mxu0 0.0
    %1495 = vmatpush2.msra.mxu0 0.0
    %1496 = vmatprep.subr.mxu0 0.0
    %1497 = vmatpush2.msra.mxu0 0.0
    %1498 = vmatprep.subr.mxu0 0.0
    %1499 = vmatpush2.msra.mxu0 0.0
    %1500 = vmatprep.subr.mxu0 0.0
    %1501 = vmatpush2.msra.mxu0 0.0
    %1502 = vmatprep.subr.mxu0 0.0
    %1503 = vmatpush2.msra.mxu0 0.0
    %1504 = vmatprep.subr.mxu0 0.0
    %1505 = vmatpush2.msra.mxu0 0.0
    %1506 = vmatprep.subr.mxu0 0.0
    %1507 = vmatpush2.msra.mxu0 0.0
    %1508 = vmatprep.subr.mxu0 0.0
    %1509 = vmatpush2.msra.mxu0 0.0
    %1510 = vmatprep.subr.mxu0 0.0
    %1511 = vmatpush2.msra.mxu0 0.0
    %1512 = vmatprep.subr.mxu0 0.0
    %1513 = vmatpush2.msra.mxu0 0.0
    %1514 = vmatprep.subr.mxu0 0.0
    %1515 = vmatpush2.msra.mxu0 0.0
    %1516 = vmatprep.subr.mxu0 0.0
    %1517 = vmatpush2.msra.mxu0 0.0
    %1518 = vmatprep.mubr.f32.mxu0 0.0
    %1519 = vmatmul.mubr.f32.gmra.mxu0 %v566
    %v1520 = vpop.f32.mrf.mxu0
    %v1521 = vadd.f32 %v563, %v1520
    %v1522 = vpop.f32.mrf.mxu0
    %v1523 = vadd.f32 %v563, %v1522
    %1524 = vdwg.mxu0
    %1526 = vrot.lane.b32.xlu0 %v1523, 17
    %v1527 = vpop.permute.xlu0 %1526
    %1530 = vrot.lane.b32.xlu0 %v1521, 17
    %v1531 = vpop.permute.xlu0 %1530
    %v1532 = vsel %vm82, %v1531, %v1527
    %v1535 = vsel %vm82, %v1527, %v1531
    %v1536 = vmul.f32 %v1535, %v91
    %v1537 = vmul.f32 %v1532, %v95
    %1538 = vst [vmem:[#allocation2] sm:$0x3] %v1536
    %1539 = vst [vmem:[#allocation2 + $0x8] sm:$0x3] %v1537
    %1540 = vrot.lane.b32.xlu0 %v1523, 16
    %v1541 = vpop.permute.xlu0 %1540
    %1543 = vrot.lane.b32.xlu0 %v1521, 16
    %v1544 = vpop.permute.xlu0 %1543
    %v1545 = vsel %vm107, %v1544, %v1541
    %v1548 = vsel %vm107, %v1541, %v1544
    %v1549 = vmul.f32 %v1548, %v116
    %v1550 = vmul.f32 %v1545, %v120
    %v1553 = vrot.slane %v1549, 6
    %v1554 = vrot.slane %v1550, 6
    %1557 = vst [vmem:[#allocation2] sm:$0xc] %v1553
    %1558 = vst [vmem:[#allocation2 + $0x8] sm:$0xc] %v1554
    %1559 = vrot.lane.b32.xlu0 %v1523, 15
    %v1560 = vpop.permute.xlu0 %1559
    %1562 = vrot.lane.b32.xlu0 %v1521, 15
    %v1563 = vpop.permute.xlu0 %1562
    %v1564 = vsel %vm138, %v1563, %v1560
    %v1567 = vsel %vm138, %v1560, %v1563
    %v1568 = vmul.f32 %v1567, %v147
    %v1569 = vmul.f32 %v1564, %v151
    %v1572 = vrot.slane %v1568, 4
    %v1573 = vrot.slane %v1569, 4
    %1576 = vst [vmem:[#allocation2] sm:$0x30] %v1572
    %1577 = vst [vmem:[#allocation2 + $0x8] sm:$0x30] %v1573
    %1578 = vrot.lane.b32.xlu0 %v1523, 1
    %v1579 = vpop.permute.xlu0 %1578
    %1581 = vrot.lane.b32.xlu0 %v1521, 1
    %v1582 = vpop.permute.xlu0 %1581
    %v1583 = vsel %vm169, %v1582, %v1579
    %v1586 = vsel %vm169, %v1579, %v1582
    %v1587 = vmul.f32 %v1586, %v178
    %v1588 = vmul.f32 %v1583, %v182
    %v1591 = vrot.slane %v1587, 2
    %v1592 = vrot.slane %v1588, 2
    %1595 = vst [vmem:[#allocation2] sm:$0xc0] %v1591
    %1596 = vst [vmem:[#allocation2 + $0x8] sm:$0xc0] %v1592
    %1597 = vst [vmem:[#allocation2 + $0x10] sm:$0x3] %v1521
    %1598 = vst [vmem:[#allocation2 + $0x18] sm:$0x3] %v1523
    %1599 = vrot.lane.b32.xlu0 %v1521, 127
    %v1600 = vpop.permute.xlu0 %1599
    %1601 = vrot.lane.b32.xlu0 %v1523, 127
    %v1602 = vpop.permute.xlu0 %1601
    %v1603 = vsel %vm203, %v1600, %v1602
    %v1607 = vsel %vm203, %v1602, %v1600
    %v1608 = vmul.f32 %v1603, %v213
    %v1609 = vmul.f32 %v1607, %v217
    %v1612 = vrot.slane %v1608, 6
    %v1613 = vrot.slane %v1609, 6
    %1616 = vst [vmem:[#allocation2 + $0x10] sm:$0xc] %v1612
    %1617 = vst [vmem:[#allocation2 + $0x18] sm:$0xc] %v1613
    %1618 = vrot.lane.b32.xlu0 %v1521, 113
    %v1619 = vpop.permute.xlu0 %1618
    %1620 = vrot.lane.b32.xlu0 %v1523, 113
    %v1621 = vpop.permute.xlu0 %1620
    %v1622 = vsel %vm234, %v1619, %v1621
    %v1626 = vsel %vm234, %v1621, %v1619
    %v1627 = vmul.f32 %v1622, %v244
    %v1628 = vmul.f32 %v1626, %v248
    %v1631 = vrot.slane %v1627, 4
    %v1632 = vrot.slane %v1628, 4
    %1635 = vst [vmem:[#allocation2 + $0x10] sm:$0x30] %v1631
    %1636 = vst [vmem:[#allocation2 + $0x18] sm:$0x30] %v1632
    %1637 = vrot.lane.b32.xlu0 %v1521, 112
    %v1638 = vpop.permute.xlu0 %1637
    %1639 = vrot.lane.b32.xlu0 %v1523, 112
    %v1640 = vpop.permute.xlu0 %1639
    %v1641 = vsel %vm265, %v1638, %v1640
    %v1645 = vsel %vm265, %v1640, %v1638
    %v1646 = vmul.f32 %v1641, %v275
    %v1647 = vmul.f32 %v1645, %v279
    %v1650 = vrot.slane %v1646, 2
    %v1651 = vrot.slane %v1647, 2
    %1654 = vst [vmem:[#allocation2 + $0x10] sm:$0xc0] %v1650
    %1655 = vst [vmem:[#allocation2 + $0x18] sm:$0xc0] %v1651
    %1656 = vrot.lane.b32.xlu0 %v1521, 111
    %v1657 = vpop.permute.xlu0 %1656
    %1658 = vrot.lane.b32.xlu0 %v1523, 111
    %v1659 = vpop.permute.xlu0 %1658
    %v1660 = vsel %vm296, %v1657, %v1659
    %v1664 = vsel %vm296, %v1659, %v1657
    %v1665 = vmul.f32 %v1660, %v306
    %v1666 = vmul.f32 %v1664, %v310
    %1667 = vst [vmem:[#allocation2 + $0x20] sm:$0x3] %v1665
    %1668 = vst [vmem:[#allocation2 + $0x28] sm:$0x3] %v1666
    %v1669 = vld [vmem:[#allocation2] sm:$0xff]
    %v1670 = vld [vmem:[#allocation2 + $0x8] sm:$0xff]
    %v1671 = vld [vmem:[#allocation2 + $0x10] sm:$0xff]
    %v1672 = vld [vmem:[#allocation2 + $0x18] sm:$0xff]
    %v1673 = vld [vmem:[#allocation2 + $0x20] sm:$0x3]
    %v1674 = vld [vmem:[#allocation2 + $0x28] sm:$0x3]
    %v1676 = vsel %vm332, %v1673, 0
    %v1679 = vsel %vm332, %v1674, 0
    %1681 = vmatprep.subr.mxu0 0.0
    %1682 = vmatpush1.msra.mxu0 0.0
    %1683 = vmatprep.subr.mxu0 0.0
    %1684 = vmatpush1.msra.mxu0 0.0
    %1685 = vmatprep.subr.mxu0 0.0
    %1686 = vmatpush1.msra.mxu0 0.0
    %1687 = vmatprep.subr.mxu0 0.0
    %1688 = vmatpush1.msra.mxu0 0.0
    %1689 = vmatprep.subr.mxu0 0.0
    %1690 = vmatpush1.msra.mxu0 0.0
    %1691 = vmatprep.subr.mxu0 0.0
    %1692 = vmatpush1.msra.mxu0 0.0
    %1693 = vmatprep.subr.mxu0 0.0
    %1694 = vmatpush1.msra.mxu0 0.0
    %1695 = vmatprep.subr.mxu0 0.0
    %1696 = vmatpush1.msra.mxu0 0.0
    %1697 = vmatprep.subr.mxu0 0.0
    %1698 = vmatpush1.msra.mxu0 0.0
    %1699 = vmatprep.subr.mxu0 0.0
    %1700 = vmatpush1.msra.mxu0 0.0
    %1701 = vmatprep.subr.mxu0 0.0
    %1702 = vmatpush1.msra.mxu0 0.0
    %1703 = vmatprep.subr.mxu0 0.0
    %1704 = vmatpush1.msra.mxu0 0.0
    %1705 = vmatprep.subr.mxu0 0.0
    %1706 = vmatpush1.msra.mxu0 0.0
    %1707 = vmatprep.subr.mxu0 %v1679
    %1708 = vmatpush1.msra.mxu0 %v1676
    %1709 = vmatprep.subr.mxu0 %v1672
    %1710 = vmatpush1.msra.mxu0 %v1671
    %1711 = vmatprep.subr.mxu0 %v1670
    %1712 = vmatpush1.msra.mxu0 %v1669
    %1713 = vmatprep.subr.mxu0 0.0
    %1714 = vmatpush2.msra.mxu0 0.0
    %1715 = vmatprep.subr.mxu0 0.0
    %1716 = vmatpush2.msra.mxu0 0.0
    %1717 = vmatprep.subr.mxu0 0.0
    %1718 = vmatpush2.msra.mxu0 0.0
    %1719 = vmatprep.subr.mxu0 0.0
    %1720 = vmatpush2.msra.mxu0 0.0
    %1721 = vmatprep.subr.mxu0 0.0
    %1722 = vmatpush2.msra.mxu0 0.0
    %1723 = vmatprep.subr.mxu0 0.0
    %1724 = vmatpush2.msra.mxu0 0.0
    %1725 = vmatprep.subr.mxu0 0.0
    %1726 = vmatpush2.msra.mxu0 0.0
    %1727 = vmatprep.subr.mxu0 0.0
    %1728 = vmatpush2.msra.mxu0 0.0
    %1729 = vmatprep.subr.mxu0 0.0
    %1730 = vmatpush2.msra.mxu0 0.0
    %1731 = vmatprep.subr.mxu0 0.0
    %1732 = vmatpush2.msra.mxu0 0.0
    %1733 = vmatprep.subr.mxu0 0.0
    %1734 = vmatpush2.msra.mxu0 0.0
    %1735 = vmatprep.subr.mxu0 0.0
    %1736 = vmatpush2.msra.mxu0 0.0
    %1737 = vmatprep.subr.mxu0 0.0
    %1738 = vmatpush2.msra.mxu0 0.0
    %1739 = vmatprep.subr.mxu0 0.0
    %1740 = vmatpush2.msra.mxu0 0.0
    %1741 = vmatprep.subr.mxu0 0.0
    %1742 = vmatpush2.msra.mxu0 0.0
    %1743 = vmatprep.subr.mxu0 0.0
    %1744 = vmatpush2.msra.mxu0 0.0
    %1745 = vmatprep.mubr.f32.mxu0 0.0
    %1746 = vmatmul.mubr.f32.gmra.mxu0 %v801
    %v1747 = vpop.f32.mrf.mxu0
    %v1748 = vadd.f32 %v798, %v1747
    %v1749 = vpop.f32.mrf.mxu0
    %v1750 = vadd.f32 %v798, %v1749
    %1751 = vdwg.mxu0
    %v1754 = vunpack.c.l.s4 1983009808
    %v1755 = vunpack.c.0.s8 %v1754
    %v1756 = vlaneseq
    %v1757 = vshrl.u32 %v1756, 7
    %v1758 = vsub.s32 %v1755, %v1757
    %v1759 = vrot.slane %v1061, %v1758
    %v1760 = vcombine.high %v1759, %v1759
    %v1761 = vsel %vm332, %v1759, 0
    %v1763 = vsel %vm332, %v1760, 0
    %1765 = vmatprep.subr.mxu0 0.0
    %1766 = vmatpush1.msra.mxu0 0.0
    %1767 = vmatprep.subr.mxu0 0.0
    %1768 = vmatpush1.msra.mxu0 0.0
    %1769 = vmatprep.subr.mxu0 0.0
    %1770 = vmatpush1.msra.mxu0 0.0
    %1771 = vmatprep.subr.mxu0 0.0
    %1772 = vmatpush1.msra.mxu0 0.0
    %1773 = vmatprep.subr.mxu0 0.0
    %1774 = vmatpush1.msra.mxu0 0.0
    %1775 = vmatprep.subr.mxu0 0.0
    %1776 = vmatpush1.msra.mxu0 0.0
    %1777 = vmatprep.subr.mxu0 0.0
    %1778 = vmatpush1.msra.mxu0 0.0
    %1779 = vmatprep.subr.mxu0 0.0
    %1780 = vmatpush1.msra.mxu0 0.0
    %1781 = vmatprep.subr.mxu0 0.0
    %1782 = vmatpush1.msra.mxu0 0.0
    %1783 = vmatprep.subr.mxu0 0.0
    %1784 = vmatpush1.msra.mxu0 0.0
    %1785 = vmatprep.subr.mxu0 0.0
    %1786 = vmatpush1.msra.mxu0 0.0
    %1787 = vmatprep.subr.mxu0 0.0
    %1788 = vmatpush1.msra.mxu0 0.0
    %1789 = vmatprep.subr.mxu0 0.0
    %1790 = vmatpush1.msra.mxu0 0.0
    %1791 = vmatprep.subr.mxu0 0.0
    %1792 = vmatpush1.msra.mxu0 0.0
    %1793 = vmatprep.subr.mxu0 0.0
    %1794 = vmatpush1.msra.mxu0 0.0
    %1795 = vmatprep.subr.mxu0 %v1763
    %1796 = vmatpush1.msra.mxu0 %v1761
    %1797 = vmatprep.subr.mxu0 0.0
    %1798 = vmatpush2.msra.mxu0 0.0
    %1799 = vmatprep.subr.mxu0 0.0
    %1800 = vmatpush2.msra.mxu0 0.0
    %1801 = vmatprep.subr.mxu0 0.0
    %1802 = vmatpush2.msra.mxu0 0.0
    %1803 = vmatprep.subr.mxu0 0.0
    %1804 = vmatpush2.msra.mxu0 0.0
    %1805 = vmatprep.subr.mxu0 0.0
    %1806 = vmatpush2.msra.mxu0 0.0
    %1807 = vmatprep.subr.mxu0 0.0
    %1808 = vmatpush2.msra.mxu0 0.0
    %1809 = vmatprep.subr.mxu0 0.0
    %1810 = vmatpush2.msra.mxu0 0.0
    %1811 = vmatprep.subr.mxu0 0.0
    %1812 = vmatpush2.msra.mxu0 0.0
    %1813 = vmatprep.subr.mxu0 0.0
    %1814 = vmatpush2.msra.mxu0 0.0
    %1815 = vmatprep.subr.mxu0 0.0
    %1816 = vmatpush2.msra.mxu0 0.0
    %1817 = vmatprep.subr.mxu0 0.0
    %1818 = vmatpush2.msra.mxu0 0.0
    %1819 = vmatprep.subr.mxu0 0.0
    %1820 = vmatpush2.msra.mxu0 0.0
    %1821 = vmatprep.subr.mxu0 0.0
    %1822 = vmatpush2.msra.mxu0 0.0
    %1823 = vmatprep.subr.mxu0 0.0
    %1824 = vmatpush2.msra.mxu0 0.0
    %1825 = vmatprep.subr.mxu0 0.0
    %1826 = vmatpush2.msra.mxu0 0.0
    %1827 = vmatprep.subr.mxu0 0.0
    %1828 = vmatpush2.msra.mxu0 0.0
    %1829 = vmatprep.mubr.f32.mxu0 0.0
    %1830 = vmatmul.mubr.f32.gmra.mxu0 %v893
    %v1831 = vpop.f32.mrf.mxu0
    %v1832 = vadd.f32 0.0, %v1831
    %v1833 = vpop.f32.mrf.mxu0
    %v1834 = vadd.f32 0.0, %v1833
    %1835 = vdwg.mxu0
    %v1837 = vsel %vm332, %v1748, 0
    %v1840 = vsel %vm332, %v1750, 0
    %1842 = vmatprep.subr.mxu0 0.0
    %1843 = vmatpush1.msra.mxu0 0.0
    %1844 = vmatprep.subr.mxu0 0.0
    %1845 = vmatpush1.msra.mxu0 0.0
    %1846 = vmatprep.subr.mxu0 0.0
    %1847 = vmatpush1.msra.mxu0 0.0
    %1848 = vmatprep.subr.mxu0 0.0
    %1849 = vmatpush1.msra.mxu0 0.0
    %1850 = vmatprep.subr.mxu0 0.0
    %1851 = vmatpush1.msra.mxu0 0.0
    %1852 = vmatprep.subr.mxu0 0.0
    %1853 = vmatpush1.msra.mxu0 0.0
    %1854 = vmatprep.subr.mxu0 0.0
    %1855 = vmatpush1.msra.mxu0 0.0
    %1856 = vmatprep.subr.mxu0 0.0
    %1857 = vmatpush1.msra.mxu0 0.0
    %1858 = vmatprep.subr.mxu0 0.0
    %1859 = vmatpush1.msra.mxu0 0.0
    %1860 = vmatprep.subr.mxu0 0.0
    %1861 = vmatpush1.msra.mxu0 0.0
    %1862 = vmatprep.subr.mxu0 0.0
    %1863 = vmatpush1.msra.mxu0 0.0
    %1864 = vmatprep.subr.mxu0 0.0
    %1865 = vmatpush1.msra.mxu0 0.0
    %1866 = vmatprep.subr.mxu0 0.0
    %1867 = vmatpush1.msra.mxu0 0.0
    %1868 = vmatprep.subr.mxu0 0.0
    %1869 = vmatpush1.msra.mxu0 0.0
    %1870 = vmatprep.subr.mxu0 0.0
    %1871 = vmatpush1.msra.mxu0 0.0
    %1872 = vmatprep.subr.mxu0 %v1840
    %1873 = vmatpush1.msra.mxu0 %v1837
    %1874 = vmatprep.subr.mxu0 0.0
    %1875 = vmatpush2.msra.mxu0 0.0
    %1876 = vmatprep.subr.mxu0 0.0
    %1877 = vmatpush2.msra.mxu0 0.0
    %1878 = vmatprep.subr.mxu0 0.0
    %1879 = vmatpush2.msra.mxu0 0.0
    %1880 = vmatprep.subr.mxu0 0.0
    %1881 = vmatpush2.msra.mxu0 0.0
    %1882 = vmatprep.subr.mxu0 0.0
    %1883 = vmatpush2.msra.mxu0 0.0
    %1884 = vmatprep.subr.mxu0 0.0
    %1885 = vmatpush2.msra.mxu0 0.0
    %1886 = vmatprep.subr.mxu0 0.0
    %1887 = vmatpush2.msra.mxu0 0.0
    %1888 = vmatprep.subr.mxu0 0.0
    %1889 = vmatpush2.msra.mxu0 0.0
    %1890 = vmatprep.subr.mxu0 0.0
    %1891 = vmatpush2.msra.mxu0 0.0
    %1892 = vmatprep.subr.mxu0 0.0
    %1893 = vmatpush2.msra.mxu0 0.0
    %1894 = vmatprep.subr.mxu0 0.0
    %1895 = vmatpush2.msra.mxu0 0.0
    %1896 = vmatprep.subr.mxu0 0.0
    %1897 = vmatpush2.msra.mxu0 0.0
    %1898 = vmatprep.subr.mxu0 0.0
    %1899 = vmatpush2.msra.mxu0 0.0
    %1900 = vmatprep.subr.mxu0 0.0
    %1901 = vmatpush2.msra.mxu0 0.0
    %1902 = vmatprep.subr.mxu0 0.0
    %1903 = vmatpush2.msra.mxu0 0.0
    %1904 = vmatprep.subr.mxu0 0.0
    %1905 = vmatpush2.msra.mxu0 0.0
    %1906 = vmatprep.mubr.f32.mxu0 0.0
    %1907 = vmatmul.mubr.f32.gmra.mxu0 %v970
    %v1908 = vpop.f32.mrf.mxu0
    %v1909 = vadd.f32 %v1832, %v1908
    %v1910 = vpop.f32.mrf.mxu0
    %v1911 = vadd.f32 %v1834, %v1910
    %1912 = vdwg.mxu0
    %v1913 = vadd.f32 %v1909, %v1052
    %v1914 = vadd.f32 %v1911, %v1052
    %s1915 = scalar_lea.vmem [#allocation6], 16
    %1916 = vst [vmem:[%s1915] sm:$0xff] %v1913
    %1917 = vst [vmem:[%s1915 + $0x8] sm:$0xff] %v1914
    // Predicated region
    $region30: #{tpu_custom_call.1} parent=1 // pred_check
      _
    $region31: #{tpu_custom_call.1} parent=1 // pred_check_branch
      %1919 = sbr.rel (0) target = $region33
    $region32: #{tpu_custom_call.1} parent=1 // pred_region
      %s1921 = ssub.s32 512, 512
      %1922 = vsyncadd [#allocation5], %s1921
      %s1923 = sshll.u32 [#allocation6], 4
      %s1924 = int_to_ptr.vmem [resolvable:$true] %s1923
      %1929 = dma.vmem_to_hbm [thread:$0]  %s1924, 512, %s6, [#allocation5], 256, 256, 16
    $region33: #{tpu_custom_call.1} parent=1 // pred_fallthru
      _
    // Predicated region
    $region34: #{tpu_custom_call.1} parent=1 // pred_check
      _
    $region35: #{tpu_custom_call.1} parent=1 // pred_check_branch
      %1931 = sbr.rel (0) target = $region37
    $region36: #{tpu_custom_call.1} parent=1 // pred_region
      %1932 = dma.done [#allocation5], 512
    $region37: #{tpu_custom_call.1} parent=1 // pred_fallthru
      _
    %1933 = vsyncpa [#allocation4], 1
    %1934 = vsyncpa [#allocation5], 1

</llo_original>
